<compile_context>
chip_gen: v5e
topology: v5e:2x2
jax: 0.10.0
libtpu: 0.0.40
codegen_flags: <defaults>
</compile_context>

<pallas_src>
import functools

import jax
import jax.numpy as jnp
from jax import lax
from jax.experimental import pallas as pl
from jax.experimental.pallas import tpu as pltpu

LOC_OUTPUT = 2  # hard-coded in the PyTorch module


def _round_up(v, m):
    return (v + m - 1) // m * m


# ---------------------------------------------------------------------------
# Fused kernel: temple 1x1 conv (-> filters), search 1x1 conv, grouped xcorr.
# One batch element per grid step; everything stays in VMEM.
# ---------------------------------------------------------------------------
def _fused_head_kernel(z_ref, x_ref, wt0_ref, wt1_ref, bt0_ref, bt1_ref,
                       ws_ref, bs_ref, mask_ref, o_ref, prod0_ref, prod1_ref,
                       *, out_scale, zh, zw, w_p, n_out_pad):
    # z_ref:   (lz, C)     template features, tap-major (k = dy*zw + dx)
    # x_ref:   (C, Np)     zero-padded search features, flattened padded grid
    # wt*_ref: (C, C)      temple conv weights for loc channel j, transposed (in, out)
    # bt*_ref: (1, C)      temple conv bias for loc channel j
    # ws_ref:  (C, C), bs_ref: (C, 1)  search conv weight / bias
    # mask_ref:(1, Np)     1.0 on valid (non-padded) pixels, else 0.0
    # o_ref:   (LOC, n_out_pad)        lane-dense per-batch output slab
    # prod*_ref: (lz, Np)  VMEM scratch: per-tap correlation maps for loc channel j

    # Filters in the (tap, in-channel) layout the xcorr needs:
    #   f_j[k, c] = out_scale * (sum_ch z[ch, k] * wt[j*C + c, ch] + bt[j*C + c])
    # (out_scale folded into the tiny operand instead of scaling the output).
    f0 = (jnp.dot(z_ref[...], wt0_ref[...], preferred_element_type=jnp.float32)
          + bt0_ref[...]) * out_scale
    f1 = (jnp.dot(z_ref[...], wt1_ref[...], preferred_element_type=jnp.float32)
          + bt1_ref[...]) * out_scale

    # 1x1 search conv on the zero-padded flattened map. The bias is masked so the
    # zero-padded border stays exactly zero, i.e. true conv zero padding.
    sp = jnp.dot(ws_ref[...], x_ref[...], preferred_element_type=jnp.float32)
    sp = sp + bs_ref[...] * mask_ref[...]

    # Per-(loc, tap) correlation maps over the whole padded grid: one MXU matmul
    # per loc channel (M = lz, K = C, N = Np).
    prod0_ref[...] = jnp.dot(f0, sp, preferred_element_type=jnp.float32)
    prod1_ref[...] = jnp.dot(f1, sp, preferred_element_type=jnp.float32)

    # Shift-and-add epilogue: tap (dy, dx) contributes its map shifted by
    # dy*w_p + dx on the flattened padded-width grid. Static unrolled loop.
    acc0 = jnp.zeros((1, n_out_pad), jnp.float32)
    acc1 = jnp.zeros((1, n_out_pad), jnp.float32)
    for k in range(zh * zw):
        dy, dx = divmod(k, zw)
        s = dy * w_p + dx
        acc0 = acc0 + prod0_ref[pl.ds(k, 1), pl.ds(s, n_out_pad)]
        acc1 = acc1 + prod1_ref[pl.ds(k, 1), pl.ds(s, n_out_pad)]

    o_ref[0:1, :] = acc0.astype(o_ref.dtype)
    o_ref[1:2, :] = acc1.astype(o_ref.dtype)


def siamfc_head_loc(params, z, x, out_scale=0.01):
    """Forward pass of SiamFC_HEAD_loc.

    params: wt (2C, C), bt (2C,), ws (C, C), bs (C,) — squeezed 1x1 conv params.
    z: (b, C, zh, zw) template, x: (b, C, h, w) search. Returns (b, 2, Ho, Wo).
    """
    wt, bt, ws, bs = params["wt"], params["bt"], params["ws"], params["bs"]
    b, c, h, w = x.shape
    bz, cz, zh, zw = z.shape
    assert b == bz and c == cz, "batch / channel mismatch between z and x"
    c2 = LOC_OUTPUT * c
    assert wt.shape == (c2, c) and bt.shape == (c2,)
    assert ws.shape == (c, c) and bs.shape == (c,)

    lz = zh * zw
    pad = zh // 2                        # F.conv2d(..., padding=zh // 2), both dims
    hp, wp = h + 2 * pad, w + 2 * pad    # padded search extents
    ho, wo = hp - zh + 1, wp - zw + 1    # conv output extents
    n_row = ho * wp                      # outputs on the padded-width grid
    n_out_pad = _round_up(n_row, 128)    # lane-dense per-batch output slab
    max_shift = (zh - 1) * wp + (zw - 1)
    np_cols = _round_up(max(hp * wp, max_shift + n_out_pad), 128)

    dt = jnp.float32
    # --- wrapper: layout plumbing only (tiny arrays / ~1.5x zero-pad of x) ----------
    z_t = jnp.transpose(z.reshape(b, c, lz), (0, 2, 1)).astype(dt)        # (b, lz, C)
    xp = jnp.pad(x.astype(dt), ((0, 0), (0, 0), (pad, pad), (pad, pad)))
    xp = xp.reshape(b, c, hp * wp)
    xp = jnp.pad(xp, ((0, 0), (0, 0), (0, np_cols - hp * wp)))            # (b, C, Np)
    mask = jnp.pad(jnp.ones((h, w), dt), ((pad, pad), (pad, pad)))
    mask = jnp.pad(mask.reshape(1, hp * wp),
                   ((0, 0), (0, np_cols - hp * wp)))                      # (1, Np)
    wt0 = jnp.transpose(wt[:c, :]).astype(dt)      # (C_in, C)  loc channel 0
    wt1 = jnp.transpose(wt[c:, :]).astype(dt)      # (C_in, C)  loc channel 1
    bt0 = bt[:c].reshape(1, c).astype(dt)
    bt1 = bt[c:].reshape(1, c).astype(dt)
    ws2 = ws.astype(dt)
    bs2 = bs.reshape(c, 1).astype(dt)

    cost = pl.CostEstimate(
        flops=int(b * (4 * lz * c * c + 2 * c * c * np_cols
                       + 4 * lz * c * np_cols + 2 * lz * n_out_pad)),
        transcendentals=0,
        bytes_accessed=int(4 * (b * (lz * c + c * np_cols + LOC_OUTPUT * n_out_pad)
                                + 3 * c * c + 3 * c + np_cols)),
    )

    out_pad = pl.pallas_call(
        functools.partial(_fused_head_kernel, out_scale=float(out_scale),
                          zh=zh, zw=zw, w_p=wp, n_out_pad=n_out_pad),
        grid=(b,),
        in_specs=[
            pl.BlockSpec((pl.Squeezed(), lz, c), lambda i: (i, 0, 0)),       # z_t
            pl.BlockSpec((pl.Squeezed(), c, np_cols), lambda i: (i, 0, 0)),  # xp
            pl.BlockSpec((c, c), lambda i: (0, 0)),                          # wt0
            pl.BlockSpec((c, c), lambda i: (0, 0)),                          # wt1
            pl.BlockSpec((1, c), lambda i: (0, 0)),                          # bt0
            pl.BlockSpec((1, c), lambda i: (0, 0)),                          # bt1
            pl.BlockSpec((c, c), lambda i: (0, 0)),                          # ws
            pl.BlockSpec((c, 1), lambda i: (0, 0)),                          # bs
            pl.BlockSpec((1, np_cols), lambda i: (0, 0)),                    # mask
        ],
        out_specs=pl.BlockSpec((pl.Squeezed(), LOC_OUTPUT, n_out_pad),
                               lambda i: (i, 0, 0)),
        out_shape=jax.ShapeDtypeStruct((b, LOC_OUTPUT, n_out_pad), dt),
        scratch_shapes=[pltpu.VMEM((lz, np_cols), jnp.float32),
                        pltpu.VMEM((lz, np_cols), jnp.float32)],
        compiler_params=pltpu.CompilerParams(
            dimension_semantics=("parallel",),
            # Per-step working set is well under 1 MiB at SiamFC-head sizes; cap
            # below v7x's 64 MiB physical VMEM (also fine on v5e/v6e's 128 MiB,
            # and above v5e's 16 MiB scoped default).
            vmem_limit_bytes=48 * 1024 * 1024,
        ),
        cost_estimate=cost,
    )(z_t, xp, wt0, wt1, bt0, bt1, ws2, bs2, mask)

    # Drop the padded-width garbage columns and the lane padding.
    out = out_pad[:, :, :n_row].reshape(b, LOC_OUTPUT, ho, wp)[:, :, :, :wo]
    return out.astype(x.dtype)


# ---------------------------------------------------------------------------
# Pure-XLA reference implementing the PyTorch module verbatim.
# ---------------------------------------------------------------------------
def _reference(params, z, x, out_scale=0.01):
    wt, bt, ws, bs = params["wt"], params["bt"], params["ws"], params["bs"]
    b, c, h, w = x.shape
    _, _, zh, zw = z.shape
    temple = jnp.einsum("oc,bcyx->boyx", wt, z,
                        precision=lax.Precision.HIGHEST) + bt[None, :, None, None]
    search = jnp.einsum("oc,bcyx->boyx", ws, x,
                        precision=lax.Precision.HIGHEST) + bs[None, :, None, None]
    pad = zh // 2
    out = lax.conv_general_dilated(
        search.reshape(1, b * c, h, w),
        temple.reshape(b * LOC_OUTPUT, c, zh, zw),
        window_strides=(1, 1),
        padding=[(pad, pad), (pad, pad)],
        dimension_numbers=("NCHW", "OIHW", "NCHW"),
        feature_group_count=b,
        precision=lax.Precision.HIGHEST,
    )
    ho = h + 2 * pad - zh + 1
    wo = w + 2 * pad - zw + 1
    return out.reshape(b, LOC_OUTPUT, ho, wo) * out_scale


if __name__ == "__main__":
    root = jax.random.PRNGKey(0)
    kz, kx, kwt, kbt, kws, kbs = jax.random.split(root, 6)

    b, c = 2, 64           # module hard-codes Conv2d(64, ...) -> 64 channels
    zh, zw = 5, 5          # small template spatial size
    h, w = 16, 16          # small search spatial size
    out_scale = 0.01

    z = jax.random.normal(kz, (b, c, zh, zw), dtype=jnp.float32)
    x = jax.random.normal(kx, (b, c, h, w), dtype=jnp.float32)
    params = {
        "wt": 0.1 * jax.random.normal(kwt, (LOC_OUTPUT * c, c), dtype=jnp.float32),
        "bt": 0.1 * jax.random.normal(kbt, (LOC_OUTPUT * c,), dtype=jnp.float32),
        "ws": 0.1 * jax.random.normal(kws, (c, c), dtype=jnp.float32),
        "bs": 0.1 * jax.random.normal(kbs, (c,), dtype=jnp.float32),
    }

    fwd = jax.jit(functools.partial(siamfc_head_loc, out_scale=out_scale))
    out = jax.block_until_ready(fwd(params, z, x))

    ref = _reference(params, z, x, out_scale=out_scale)
    assert out.shape == ref.shape == (b, LOC_OUTPUT, h, w), out.shape
    max_err = float(jnp.max(jnp.abs(out - ref)))
    assert jnp.allclose(out, ref, atol=2e-4, rtol=2e-4), (
        f"mismatch vs reference (max abs err {max_err})")

    print("KERNEL_OK")
</pallas_src>

<mosaic_0001>
module attributes {stable_mosaic.version = 11 : i64} {
  func.func @_fused_head_kernel(%arg0: i32, %arg1: memref<1x25x64xf32, #tpu.memory_space<vmem>>, %arg2: memref<1x64x512xf32, #tpu.memory_space<vmem>>, %arg3: memref<64x64xf32, #tpu.memory_space<vmem>>, %arg4: memref<64x64xf32, #tpu.memory_space<vmem>>, %arg5: memref<1x64xf32, #tpu.memory_space<vmem>>, %arg6: memref<1x64xf32, #tpu.memory_space<vmem>>, %arg7: memref<64x64xf32, #tpu.memory_space<vmem>>, %arg8: memref<64x1xf32, #tpu.memory_space<vmem>>, %arg9: memref<1x512xf32, #tpu.memory_space<vmem>>, %arg10: memref<1x2x384xf32, #tpu.memory_space<vmem>>, %arg11: memref<25x512xf32, #tpu.memory_space<vmem>>, %arg12: memref<25x512xf32, #tpu.memory_space<vmem>>) attributes {dimension_semantics = [#tpu.dimension_semantics<parallel>], iteration_bounds = array<i64: 2>, scalar_prefetch = 0 : i64, scratch_operands = 2 : i64, tpu.core_type = #tpu.core_type<tc>, window_params = [{transform_indices = @transform_0, window_bounds = array<i64: 1, 25, 64>}, {transform_indices = @transform_1, window_bounds = array<i64: 1, 64, 512>}, {pipeline_mode = #tpu.pipeline_mode<synchronous>, transform_indices = @transform_2, window_bounds = array<i64: 64, 64>}, {pipeline_mode = #tpu.pipeline_mode<synchronous>, transform_indices = @transform_3, window_bounds = array<i64: 64, 64>}, {pipeline_mode = #tpu.pipeline_mode<synchronous>, transform_indices = @transform_4, window_bounds = array<i64: 1, 64>}, {pipeline_mode = #tpu.pipeline_mode<synchronous>, transform_indices = @transform_5, window_bounds = array<i64: 1, 64>}, {pipeline_mode = #tpu.pipeline_mode<synchronous>, transform_indices = @transform_6, window_bounds = array<i64: 64, 64>}, {pipeline_mode = #tpu.pipeline_mode<synchronous>, transform_indices = @transform_7, window_bounds = array<i64: 64, 1>}, {pipeline_mode = #tpu.pipeline_mode<synchronous>, transform_indices = @transform_8, window_bounds = array<i64: 1, 512>}, {transform_indices = @transform_9, window_bounds = array<i64: 1, 2, 384>}]} {
    %c0 = arith.constant 0 : index
    %c0_0 = arith.constant 0 : index
    %c0_1 = arith.constant 0 : index
    %0 = vector.load %arg1[%c0, %c0_0, %c0_1] : memref<1x25x64xf32, #tpu.memory_space<vmem>>, vector<1x25x64xf32>
    %1 = vector.shape_cast %0 : vector<1x25x64xf32> to vector<25x64xf32>
    %c0_2 = arith.constant 0 : index
    %c0_3 = arith.constant 0 : index
    %2 = vector.load %arg3[%c0_2, %c0_3] : memref<64x64xf32, #tpu.memory_space<vmem>>, vector<64x64xf32>
    %cst = arith.constant dense<0.000000e+00> : vector<25x64xf32>
    %3 = tpu.matmul %1, %2, %cst {dimension_numbers = #tpu.dot_dimension_numbers<[1], [0], [0], [1], [0, 0, 1, 1], [], []>} : vector<25x64xf32>, vector<64x64xf32>, vector<25x64xf32> -> vector<25x64xf32>
    %c0_4 = arith.constant 0 : index
    %c0_5 = arith.constant 0 : index
    %4 = vector.load %arg5[%c0_4, %c0_5] : memref<1x64xf32, #tpu.memory_space<vmem>>, vector<1x64xf32>
    %5 = vector.broadcast %4 : vector<1x64xf32> to vector<25x64xf32>
    %6 = arith.addf %3, %5 : vector<25x64xf32>
    %cst_6 = arith.constant 0.00999999977 : f32
    %7 = vector.broadcast %cst_6 : f32 to vector<25x64xf32>
    %8 = arith.mulf %6, %7 : vector<25x64xf32>
    %c0_7 = arith.constant 0 : index
    %c0_8 = arith.constant 0 : index
    %c0_9 = arith.constant 0 : index
    %9 = vector.load %arg1[%c0_7, %c0_8, %c0_9] : memref<1x25x64xf32, #tpu.memory_space<vmem>>, vector<1x25x64xf32>
    %10 = vector.shape_cast %9 : vector<1x25x64xf32> to vector<25x64xf32>
    %c0_10 = arith.constant 0 : index
    %c0_11 = arith.constant 0 : index
    %11 = vector.load %arg4[%c0_10, %c0_11] : memref<64x64xf32, #tpu.memory_space<vmem>>, vector<64x64xf32>
    %cst_12 = arith.constant dense<0.000000e+00> : vector<25x64xf32>
    %12 = tpu.matmul %10, %11, %cst_12 {dimension_numbers = #tpu.dot_dimension_numbers<[1], [0], [0], [1], [0, 0, 1, 1], [], []>} : vector<25x64xf32>, vector<64x64xf32>, vector<25x64xf32> -> vector<25x64xf32>
    %c0_13 = arith.constant 0 : index
    %c0_14 = arith.constant 0 : index
    %13 = vector.load %arg6[%c0_13, %c0_14] : memref<1x64xf32, #tpu.memory_space<vmem>>, vector<1x64xf32>
    %14 = vector.broadcast %13 : vector<1x64xf32> to vector<25x64xf32>
    %15 = arith.addf %12, %14 : vector<25x64xf32>
    %cst_15 = arith.constant 0.00999999977 : f32
    %16 = vector.broadcast %cst_15 : f32 to vector<25x64xf32>
    %17 = arith.mulf %15, %16 : vector<25x64xf32>
    %c0_16 = arith.constant 0 : index
    %c0_17 = arith.constant 0 : index
    %18 = vector.load %arg7[%c0_16, %c0_17] : memref<64x64xf32, #tpu.memory_space<vmem>>, vector<64x64xf32>
    %c0_18 = arith.constant 0 : index
    %c0_19 = arith.constant 0 : index
    %c0_20 = arith.constant 0 : index
    %19 = vector.load %arg2[%c0_18, %c0_19, %c0_20] : memref<1x64x512xf32, #tpu.memory_space<vmem>>, vector<1x64x512xf32>
    %20 = vector.shape_cast %19 : vector<1x64x512xf32> to vector<64x512xf32>
    %cst_21 = arith.constant dense<0.000000e+00> : vector<64x512xf32>
    %21 = tpu.matmul %18, %20, %cst_21 {dimension_numbers = #tpu.dot_dimension_numbers<[1], [0], [0], [1], [0, 0, 1, 1], [], []>} : vector<64x64xf32>, vector<64x512xf32>, vector<64x512xf32> -> vector<64x512xf32>
    %c0_22 = arith.constant 0 : index
    %c0_23 = arith.constant 0 : index
    %22 = vector.load %arg8[%c0_22, %c0_23] : memref<64x1xf32, #tpu.memory_space<vmem>>, vector<64x1xf32>
    %c0_24 = arith.constant 0 : index
    %c0_25 = arith.constant 0 : index
    %23 = vector.load %arg9[%c0_24, %c0_25] : memref<1x512xf32, #tpu.memory_space<vmem>>, vector<1x512xf32>
    %24 = vector.broadcast %22 : vector<64x1xf32> to vector<64x512xf32>
    %25 = vector.broadcast %23 : vector<1x512xf32> to vector<64x512xf32>
    %26 = arith.mulf %24, %25 : vector<64x512xf32>
    %27 = arith.addf %21, %26 : vector<64x512xf32>
    %cst_26 = arith.constant dense<0.000000e+00> : vector<25x512xf32>
    %28 = tpu.matmul %8, %27, %cst_26 {dimension_numbers = #tpu.dot_dimension_numbers<[1], [0], [0], [1], [0, 0, 1, 1], [], []>} : vector<25x64xf32>, vector<64x512xf32>, vector<25x512xf32> -> vector<25x512xf32>
    %c0_27 = arith.constant 0 : index
    %c0_28 = arith.constant 0 : index
    %29 = vector.load %arg11[%c0_27, %c0_28] : memref<25x512xf32, #tpu.memory_space<vmem>>, vector<25x512xf32>
    tpu.vector_store %arg11[%c0_27, %c0_28], %28 {strides = array<i32>} : memref<25x512xf32, #tpu.memory_space<vmem>>, vector<25x512xf32>,
    %cst_29 = arith.constant dense<0.000000e+00> : vector<25x512xf32>
    %30 = tpu.matmul %17, %27, %cst_29 {dimension_numbers = #tpu.dot_dimension_numbers<[1], [0], [0], [1], [0, 0, 1, 1], [], []>} : vector<25x64xf32>, vector<64x512xf32>, vector<25x512xf32> -> vector<25x512xf32>
    %c0_30 = arith.constant 0 : index
    %c0_31 = arith.constant 0 : index
    %31 = vector.load %arg12[%c0_30, %c0_31] : memref<25x512xf32, #tpu.memory_space<vmem>>, vector<25x512xf32>
    tpu.vector_store %arg12[%c0_30, %c0_31], %30 {strides = array<i32>} : memref<25x512xf32, #tpu.memory_space<vmem>>, vector<25x512xf32>,
    %cst_32 = arith.constant 0.000000e+00 : f32
    %32 = vector.broadcast %cst_32 : f32 to vector<1x384xf32>
    %cst_33 = arith.constant 0.000000e+00 : f32
    %33 = vector.broadcast %cst_33 : f32 to vector<1x384xf32>
    %c0_34 = arith.constant 0 : index
    %c0_35 = arith.constant 0 : index
    %34 = vector.load %arg11[%c0_34, %c0_35] : memref<25x512xf32, #tpu.memory_space<vmem>>, vector<1x384xf32>
    %35 = arith.addf %32, %34 : vector<1x384xf32>
    %c0_36 = arith.constant 0 : index
    %c0_37 = arith.constant 0 : index
    %36 = vector.load %arg12[%c0_36, %c0_37] : memref<25x512xf32, #tpu.memory_space<vmem>>, vector<1x384xf32>
    %37 = arith.addf %33, %36 : vector<1x384xf32>
    %c1 = arith.constant 1 : index
    %c1_38 = arith.constant 1 : index
    %38 = vector.load %arg11[%c1, %c1_38] : memref<25x512xf32, #tpu.memory_space<vmem>>, vector<1x384xf32>
    %39 = arith.addf %35, %38 : vector<1x384xf32>
    %c1_39 = arith.constant 1 : index
    %c1_40 = arith.constant 1 : index
    %40 = vector.load %arg12[%c1_39, %c1_40] : memref<25x512xf32, #tpu.memory_space<vmem>>, vector<1x384xf32>
    %41 = arith.addf %37, %40 : vector<1x384xf32>
    %c2 = arith.constant 2 : index
    %c2_41 = arith.constant 2 : index
    %42 = vector.load %arg11[%c2, %c2_41] : memref<25x512xf32, #tpu.memory_space<vmem>>, vector<1x384xf32>
    %43 = arith.addf %39, %42 : vector<1x384xf32>
    %c2_42 = arith.constant 2 : index
    %c2_43 = arith.constant 2 : index
    %44 = vector.load %arg12[%c2_42, %c2_43] : memref<25x512xf32, #tpu.memory_space<vmem>>, vector<1x384xf32>
    %45 = arith.addf %41, %44 : vector<1x384xf32>
    %c3 = arith.constant 3 : index
    %c3_44 = arith.constant 3 : index
    %46 = vector.load %arg11[%c3, %c3_44] : memref<25x512xf32, #tpu.memory_space<vmem>>, vector<1x384xf32>
    %47 = arith.addf %43, %46 : vector<1x384xf32>
    %c3_45 = arith.constant 3 : index
    %c3_46 = arith.constant 3 : index
    %48 = vector.load %arg12[%c3_45, %c3_46] : memref<25x512xf32, #tpu.memory_space<vmem>>, vector<1x384xf32>
    %49 = arith.addf %45, %48 : vector<1x384xf32>
    %c4 = arith.constant 4 : index
    %c4_47 = arith.constant 4 : index
    %50 = vector.load %arg11[%c4, %c4_47] : memref<25x512xf32, #tpu.memory_space<vmem>>, vector<1x384xf32>
    %51 = arith.addf %47, %50 : vector<1x384xf32>
    %c4_48 = arith.constant 4 : index
    %c4_49 = arith.constant 4 : index
    %52 = vector.load %arg12[%c4_48, %c4_49] : memref<25x512xf32, #tpu.memory_space<vmem>>, vector<1x384xf32>
    %53 = arith.addf %49, %52 : vector<1x384xf32>
    %c5 = arith.constant 5 : index
    %c20 = arith.constant 20 : index
    %54 = vector.load %arg11[%c5, %c20] : memref<25x512xf32, #tpu.memory_space<vmem>>, vector<1x384xf32>
    %55 = arith.addf %51, %54 : vector<1x384xf32>
    %c5_50 = arith.constant 5 : index
    %c20_51 = arith.constant 20 : index
    %56 = vector.load %arg12[%c5_50, %c20_51] : memref<25x512xf32, #tpu.memory_space<vmem>>, vector<1x384xf32>
    %57 = arith.addf %53, %56 : vector<1x384xf32>
    %c6 = arith.constant 6 : index
    %c21 = arith.constant 21 : index
    %58 = vector.load %arg11[%c6, %c21] : memref<25x512xf32, #tpu.memory_space<vmem>>, vector<1x384xf32>
    %59 = arith.addf %55, %58 : vector<1x384xf32>
    %c6_52 = arith.constant 6 : index
    %c21_53 = arith.constant 21 : index
    %60 = vector.load %arg12[%c6_52, %c21_53] : memref<25x512xf32, #tpu.memory_space<vmem>>, vector<1x384xf32>
    %61 = arith.addf %57, %60 : vector<1x384xf32>
    %c7 = arith.constant 7 : index
    %c22 = arith.constant 22 : index
    %62 = vector.load %arg11[%c7, %c22] : memref<25x512xf32, #tpu.memory_space<vmem>>, vector<1x384xf32>
    %63 = arith.addf %59, %62 : vector<1x384xf32>
    %c7_54 = arith.constant 7 : index
    %c22_55 = arith.constant 22 : index
    %64 = vector.load %arg12[%c7_54, %c22_55] : memref<25x512xf32, #tpu.memory_space<vmem>>, vector<1x384xf32>
    %65 = arith.addf %61, %64 : vector<1x384xf32>
    %c8 = arith.constant 8 : index
    %c23 = arith.constant 23 : index
    %66 = vector.load %arg11[%c8, %c23] : memref<25x512xf32, #tpu.memory_space<vmem>>, vector<1x384xf32>
    %67 = arith.addf %63, %66 : vector<1x384xf32>
    %c8_56 = arith.constant 8 : index
    %c23_57 = arith.constant 23 : index
    %68 = vector.load %arg12[%c8_56, %c23_57] : memref<25x512xf32, #tpu.memory_space<vmem>>, vector<1x384xf32>
    %69 = arith.addf %65, %68 : vector<1x384xf32>
    %c9 = arith.constant 9 : index
    %c24 = arith.constant 24 : index
    %70 = vector.load %arg11[%c9, %c24] : memref<25x512xf32, #tpu.memory_space<vmem>>, vector<1x384xf32>
    %71 = arith.addf %67, %70 : vector<1x384xf32>
    %c9_58 = arith.constant 9 : index
    %c24_59 = arith.constant 24 : index
    %72 = vector.load %arg12[%c9_58, %c24_59] : memref<25x512xf32, #tpu.memory_space<vmem>>, vector<1x384xf32>
    %73 = arith.addf %69, %72 : vector<1x384xf32>
    %c10 = arith.constant 10 : index
    %c40 = arith.constant 40 : index
    %74 = vector.load %arg11[%c10, %c40] : memref<25x512xf32, #tpu.memory_space<vmem>>, vector<1x384xf32>
    %75 = arith.addf %71, %74 : vector<1x384xf32>
    %c10_60 = arith.constant 10 : index
    %c40_61 = arith.constant 40 : index
    %76 = vector.load %arg12[%c10_60, %c40_61] : memref<25x512xf32, #tpu.memory_space<vmem>>, vector<1x384xf32>
    %77 = arith.addf %73, %76 : vector<1x384xf32>
    %c11 = arith.constant 11 : index
    %c41 = arith.constant 41 : index
    %78 = vector.load %arg11[%c11, %c41] : memref<25x512xf32, #tpu.memory_space<vmem>>, vector<1x384xf32>
    %79 = arith.addf %75, %78 : vector<1x384xf32>
    %c11_62 = arith.constant 11 : index
    %c41_63 = arith.constant 41 : index
    %80 = vector.load %arg12[%c11_62, %c41_63] : memref<25x512xf32, #tpu.memory_space<vmem>>, vector<1x384xf32>
    %81 = arith.addf %77, %80 : vector<1x384xf32>
    %c12 = arith.constant 12 : index
    %c42 = arith.constant 42 : index
    %82 = vector.load %arg11[%c12, %c42] : memref<25x512xf32, #tpu.memory_space<vmem>>, vector<1x384xf32>
    %83 = arith.addf %79, %82 : vector<1x384xf32>
    %c12_64 = arith.constant 12 : index
    %c42_65 = arith.constant 42 : index
    %84 = vector.load %arg12[%c12_64, %c42_65] : memref<25x512xf32, #tpu.memory_space<vmem>>, vector<1x384xf32>
    %85 = arith.addf %81, %84 : vector<1x384xf32>
    %c13 = arith.constant 13 : index
    %c43 = arith.constant 43 : index
    %86 = vector.load %arg11[%c13, %c43] : memref<25x512xf32, #tpu.memory_space<vmem>>, vector<1x384xf32>
    %87 = arith.addf %83, %86 : vector<1x384xf32>
    %c13_66 = arith.constant 13 : index
    %c43_67 = arith.constant 43 : index
    %88 = vector.load %arg12[%c13_66, %c43_67] : memref<25x512xf32, #tpu.memory_space<vmem>>, vector<1x384xf32>
    %89 = arith.addf %85, %88 : vector<1x384xf32>
    %c14 = arith.constant 14 : index
    %c44 = arith.constant 44 : index
    %90 = vector.load %arg11[%c14, %c44] : memref<25x512xf32, #tpu.memory_space<vmem>>, vector<1x384xf32>
    %91 = arith.addf %87, %90 : vector<1x384xf32>
    %c14_68 = arith.constant 14 : index
    %c44_69 = arith.constant 44 : index
    %92 = vector.load %arg12[%c14_68, %c44_69] : memref<25x512xf32, #tpu.memory_space<vmem>>, vector<1x384xf32>
    %93 = arith.addf %89, %92 : vector<1x384xf32>
    %c15 = arith.constant 15 : index
    %c60 = arith.constant 60 : index
    %94 = vector.load %arg11[%c15, %c60] : memref<25x512xf32, #tpu.memory_space<vmem>>, vector<1x384xf32>
    %95 = arith.addf %91, %94 : vector<1x384xf32>
    %c15_70 = arith.constant 15 : index
    %c60_71 = arith.constant 60 : index
    %96 = vector.load %arg12[%c15_70, %c60_71] : memref<25x512xf32, #tpu.memory_space<vmem>>, vector<1x384xf32>
    %97 = arith.addf %93, %96 : vector<1x384xf32>
    %c16 = arith.constant 16 : index
    %c61 = arith.constant 61 : index
    %98 = vector.load %arg11[%c16, %c61] : memref<25x512xf32, #tpu.memory_space<vmem>>, vector<1x384xf32>
    %99 = arith.addf %95, %98 : vector<1x384xf32>
    %c16_72 = arith.constant 16 : index
    %c61_73 = arith.constant 61 : index
    %100 = vector.load %arg12[%c16_72, %c61_73] : memref<25x512xf32, #tpu.memory_space<vmem>>, vector<1x384xf32>
    %101 = arith.addf %97, %100 : vector<1x384xf32>
    %c17 = arith.constant 17 : index
    %c62 = arith.constant 62 : index
    %102 = vector.load %arg11[%c17, %c62] : memref<25x512xf32, #tpu.memory_space<vmem>>, vector<1x384xf32>
    %103 = arith.addf %99, %102 : vector<1x384xf32>
    %c17_74 = arith.constant 17 : index
    %c62_75 = arith.constant 62 : index
    %104 = vector.load %arg12[%c17_74, %c62_75] : memref<25x512xf32, #tpu.memory_space<vmem>>, vector<1x384xf32>
    %105 = arith.addf %101, %104 : vector<1x384xf32>
    %c18 = arith.constant 18 : index
    %c63 = arith.constant 63 : index
    %106 = vector.load %arg11[%c18, %c63] : memref<25x512xf32, #tpu.memory_space<vmem>>, vector<1x384xf32>
    %107 = arith.addf %103, %106 : vector<1x384xf32>
    %c18_76 = arith.constant 18 : index
    %c63_77 = arith.constant 63 : index
    %108 = vector.load %arg12[%c18_76, %c63_77] : memref<25x512xf32, #tpu.memory_space<vmem>>, vector<1x384xf32>
    %109 = arith.addf %105, %108 : vector<1x384xf32>
    %c19 = arith.constant 19 : index
    %c64 = arith.constant 64 : index
    %110 = vector.load %arg11[%c19, %c64] : memref<25x512xf32, #tpu.memory_space<vmem>>, vector<1x384xf32>
    %111 = arith.addf %107, %110 : vector<1x384xf32>
    %c19_78 = arith.constant 19 : index
    %c64_79 = arith.constant 64 : index
    %112 = vector.load %arg12[%c19_78, %c64_79] : memref<25x512xf32, #tpu.memory_space<vmem>>, vector<1x384xf32>
    %113 = arith.addf %109, %112 : vector<1x384xf32>
    %c20_80 = arith.constant 20 : index
    %c80 = arith.constant 80 : index
    %114 = vector.load %arg11[%c20_80, %c80] : memref<25x512xf32, #tpu.memory_space<vmem>>, vector<1x384xf32>
    %115 = arith.addf %111, %114 : vector<1x384xf32>
    %c20_81 = arith.constant 20 : index
    %c80_82 = arith.constant 80 : index
    %116 = vector.load %arg12[%c20_81, %c80_82] : memref<25x512xf32, #tpu.memory_space<vmem>>, vector<1x384xf32>
    %117 = arith.addf %113, %116 : vector<1x384xf32>
    %c21_83 = arith.constant 21 : index
    %c81 = arith.constant 81 : index
    %118 = vector.load %arg11[%c21_83, %c81] : memref<25x512xf32, #tpu.memory_space<vmem>>, vector<1x384xf32>
    %119 = arith.addf %115, %118 : vector<1x384xf32>
    %c21_84 = arith.constant 21 : index
    %c81_85 = arith.constant 81 : index
    %120 = vector.load %arg12[%c21_84, %c81_85] : memref<25x512xf32, #tpu.memory_space<vmem>>, vector<1x384xf32>
    %121 = arith.addf %117, %120 : vector<1x384xf32>
    %c22_86 = arith.constant 22 : index
    %c82 = arith.constant 82 : index
    %122 = vector.load %arg11[%c22_86, %c82] : memref<25x512xf32, #tpu.memory_space<vmem>>, vector<1x384xf32>
    %123 = arith.addf %119, %122 : vector<1x384xf32>
    %c22_87 = arith.constant 22 : index
    %c82_88 = arith.constant 82 : index
    %124 = vector.load %arg12[%c22_87, %c82_88] : memref<25x512xf32, #tpu.memory_space<vmem>>, vector<1x384xf32>
    %125 = arith.addf %121, %124 : vector<1x384xf32>
    %c23_89 = arith.constant 23 : index
    %c83 = arith.constant 83 : index
    %126 = vector.load %arg11[%c23_89, %c83] : memref<25x512xf32, #tpu.memory_space<vmem>>, vector<1x384xf32>
    %127 = arith.addf %123, %126 : vector<1x384xf32>
    %c23_90 = arith.constant 23 : index
    %c83_91 = arith.constant 83 : index
    %128 = vector.load %arg12[%c23_90, %c83_91] : memref<25x512xf32, #tpu.memory_space<vmem>>, vector<1x384xf32>
    %129 = arith.addf %125, %128 : vector<1x384xf32>
    %c24_92 = arith.constant 24 : index
    %c84 = arith.constant 84 : index
    %130 = vector.load %arg11[%c24_92, %c84] : memref<25x512xf32, #tpu.memory_space<vmem>>, vector<1x384xf32>
    %131 = arith.addf %127, %130 : vector<1x384xf32>
    %c24_93 = arith.constant 24 : index
    %c84_94 = arith.constant 84 : index
    %132 = vector.load %arg12[%c24_93, %c84_94] : memref<25x512xf32, #tpu.memory_space<vmem>>, vector<1x384xf32>
    %133 = arith.addf %129, %132 : vector<1x384xf32>
    %c0_95 = arith.constant 0 : index
    %c0_96 = arith.constant 0 : index
    %c0_97 = arith.constant 0 : index
    %134 = vector.load %arg10[%c0_95, %c0_96, %c0_97] : memref<1x2x384xf32, #tpu.memory_space<vmem>>, vector<1x1x384xf32>
    %135 = vector.shape_cast %134 : vector<1x1x384xf32> to vector<1x384xf32>
    %136 = vector.shape_cast %131 : vector<1x384xf32> to vector<1x1x384xf32>
    tpu.vector_store %arg10[%c0_95, %c0_96, %c0_97], %136 {strides = array<i32>} : memref<1x2x384xf32, #tpu.memory_space<vmem>>, vector<1x1x384xf32>,
    %c0_98 = arith.constant 0 : index
    %c1_99 = arith.constant 1 : index
    %c0_100 = arith.constant 0 : index
    %137 = vector.load %arg10[%c0_98, %c1_99, %c0_100] : memref<1x2x384xf32, #tpu.memory_space<vmem>>, vector<1x1x384xf32>
    %138 = vector.shape_cast %137 : vector<1x1x384xf32> to vector<1x384xf32>
    %139 = vector.shape_cast %133 : vector<1x384xf32> to vector<1x1x384xf32>
    tpu.vector_store %arg10[%c0_98, %c1_99, %c0_100], %139 {strides = array<i32>} : memref<1x2x384xf32, #tpu.memory_space<vmem>>, vector<1x1x384xf32>,
    return
  }
  func.func @transform_0(%arg0: i32) -> (i32, i32, i32) {
    %c0_i32 = arith.constant 0 : i32
    %c0_i32_0 = arith.constant 0 : i32
    %c0_i32_1 = arith.constant 0 : i32
    return %arg0, %c0_i32, %c0_i32_0 : i32, i32, i32
  }
  func.func @transform_1(%arg0: i32) -> (i32, i32, i32) {
    %c0_i32 = arith.constant 0 : i32
    %c0_i32_0 = arith.constant 0 : i32
    %c0_i32_1 = arith.constant 0 : i32
    return %arg0, %c0_i32, %c0_i32_0 : i32, i32, i32
  }
  func.func @transform_2(%arg0: i32) -> (i32, i32) {
    %c0_i32 = arith.constant 0 : i32
    %c0_i32_0 = arith.constant 0 : i32
    %c0_i32_1 = arith.constant 0 : i32
    return %c0_i32, %c0_i32_0 : i32, i32
  }
  func.func @transform_3(%arg0: i32) -> (i32, i32) {
    %c0_i32 = arith.constant 0 : i32
    %c0_i32_0 = arith.constant 0 : i32
    %c0_i32_1 = arith.constant 0 : i32
    return %c0_i32, %c0_i32_0 : i32, i32
  }
  func.func @transform_4(%arg0: i32) -> (i32, i32) {
    %c0_i32 = arith.constant 0 : i32
    %c0_i32_0 = arith.constant 0 : i32
    %c0_i32_1 = arith.constant 0 : i32
    return %c0_i32, %c0_i32_0 : i32, i32
  }
  func.func @transform_5(%arg0: i32) -> (i32, i32) {
    %c0_i32 = arith.constant 0 : i32
    %c0_i32_0 = arith.constant 0 : i32
    %c0_i32_1 = arith.constant 0 : i32
    return %c0_i32, %c0_i32_0 : i32, i32
  }
  func.func @transform_6(%arg0: i32) -> (i32, i32) {
    %c0_i32 = arith.constant 0 : i32
    %c0_i32_0 = arith.constant 0 : i32
    %c0_i32_1 = arith.constant 0 : i32
    return %c0_i32, %c0_i32_0 : i32, i32
  }
  func.func @transform_7(%arg0: i32) -> (i32, i32) {
    %c0_i32 = arith.constant 0 : i32
    %c0_i32_0 = arith.constant 0 : i32
    %c0_i32_1 = arith.constant 0 : i32
    return %c0_i32, %c0_i32_0 : i32, i32
  }
  func.func @transform_8(%arg0: i32) -> (i32, i32) {
    %c0_i32 = arith.constant 0 : i32
    %c0_i32_0 = arith.constant 0 : i32
    %c0_i32_1 = arith.constant 0 : i32
    return %c0_i32, %c0_i32_0 : i32, i32
  }
  func.func @transform_9(%arg0: i32) -> (i32, i32, i32) {
    %c0_i32 = arith.constant 0 : i32
    %c0_i32_0 = arith.constant 0 : i32
    %c0_i32_1 = arith.constant 0 : i32
    return %arg0, %c0_i32, %c0_i32_0 : i32, i32, i32
  }
}

</mosaic_0001>

<llo_original>
// kernel: siamfc_head_loc.1
$region0: #{siamfc_head_loc.1}
  #allocation0 [shape = 'u32[]', space=smem, size = 0x4, offset = 0x4, fixed_abs, tag = 'smem constant byte address 0x4 - core index']
  #allocation1 [shape = 'u32[72,128]{1,0:T(1,128)}', space=vmem, size = 0x9000, scoped, tag = 'internal scratch']
  #allocation2 [shape = 'f32[25,512]{1,0:T(8,128)}', space=vmem, size = 0x10000, scoped, tag = 'scratch operand']
  #allocation3 [shape = 'f32[25,512]{1,0:T(8,128)}', space=vmem, size = 0x10000, scoped, tag = 'scratch operand']
  %s0 = inlined_call_operand.vmem [shape: f32[2,25,64], index: 0, kind: input, shape index: {}]
  %s1 = inlined_call_operand.vmem [shape: f32[2,64,512], index: 1, kind: input, shape index: {}]
  %s2 = inlined_call_operand.vmem [shape: f32[64,64], index: 2, kind: input, shape index: {}]
  %s3 = inlined_call_operand.vmem [shape: f32[64,64], index: 3, kind: input, shape index: {}]
  %s4 = inlined_call_operand.vmem [shape: f32[1,64], index: 4, kind: input, shape index: {}]
  %s5 = inlined_call_operand.vmem [shape: f32[1,64], index: 5, kind: input, shape index: {}]
  %s6 = inlined_call_operand.vmem [shape: f32[64,64], index: 6, kind: input, shape index: {}]
  %s7 = inlined_call_operand.vmem [shape: f32[64,1], index: 7, kind: input, shape index: {}]
  %s8 = inlined_call_operand.vmem [shape: f32[1,512], index: 8, kind: input, shape index: {}]
  %s9 = inlined_call_operand.vmem [shape: f32[2,2,384], index: 9, kind: output, shape index: {}]
  %s10 = sld [smem:[#allocation0]]
  $region69: #{siamfc_head_loc.1} parent=0
    _
  %s12 = ssub.s32 1, %s10
  %s13 = scalar_select 0, %s12, %s10
  loop: start=0, step=1, limit=4
  $region2: #{siamfc_head_loc.1} parent=0 // loop_pre_header
    _
  $region3: #{siamfc_head_loc.1} parent=0 // loop_header
    %s15 = sphi 0, %s19
    %p16 = scmp.ge.s32.totalorder %s15, 4
    %s25 = sphi 0, %s27
    %s28 = sphi 0, %s25
    %s29 = sphi 0, %s28
    %s45 = sphi 0, %s29
    %s51 = sphi 0, %s53
    %s54 = sphi 0, %s51
    %s55 = sphi 0, %s54
    %s71 = sphi 0, %s55
    %s75 = sphi 0, %s75
    %s77 = sphi 0, %s75
    %s78 = sphi 0, %s77
    %s92 = sphi 0, %s78
    %s96 = sphi 0, %s96
    %s98 = sphi 0, %s96
    %s99 = sphi 0, %s98
    %s113 = sphi 0, %s99
    %s117 = sphi 0, %s117
    %s119 = sphi 0, %s117
    %s120 = sphi 0, %s119
    %s134 = sphi 0, %s120
    %s138 = sphi 0, %s138
    %s140 = sphi 0, %s138
    %s141 = sphi 0, %s140
    %s155 = sphi 0, %s141
    %s159 = sphi 0, %s159
    %s161 = sphi 0, %s159
    %s162 = sphi 0, %s161
    %s176 = sphi 0, %s162
    %s180 = sphi 0, %s180
    %s182 = sphi 0, %s180
    %s183 = sphi 0, %s182
    %s197 = sphi 0, %s183
    %s201 = sphi 0, %s201
    %s203 = sphi 0, %s201
    %s204 = sphi 0, %s203
    %s218 = sphi 0, %s204
    %s224 = sphi 0, %s226
    %s227 = sphi 0, %s224
    %s228 = sphi 0, %s227
    %s244 = sphi 0, %s228
  $region4: #{siamfc_head_loc.1} parent=0 // loop_header_branch
    %18 = sbr.rel (%p16) target = $region8
  $region5: #{siamfc_head_loc.1} parent=0 // loop_body
    %s20 = ssub.s32 %s15, 1
    %s21 = ssub.s32 %s15, 2
    %s22 = sadd.s32 %s15, 1
    %s23 = ssub.s32 %s15, %s22
    %p24 = scmp.eq.s32.totalorder %s23, 0
    %s26 = sadd.s32 %s25, 1
    %s27 = scalar_select %p24, %s25, %s26
    %p30 = pneg %p24
    %p31 = scmp.eq.s32.totalorder %s15, 1
    %p32 = por %p30, %p31
    %p33 = scmp.ne.s32.totalorder %s25, %s28
    %p34 = scmp.eq.s32.totalorder %s15, 0
    %p35 = por %p33, %p34
    %p36 = scmp.ne.s32.totalorder %s25, %s28
    %p37 = scmp.eq.s32.totalorder %s20, 1
    %p38 = por %p36, %p37
    %p39 = scmp.ne.s32.totalorder %s28, %s29
    %p40 = scmp.eq.s32.totalorder %s20, 0
    %p41 = por %p39, %p40
    %p42 = scmp.ne.s32.totalorder %s28, %s29
    %p43 = scmp.eq.s32.totalorder %s21, 1
    %p44 = por %p42, %p43
    %p46 = scmp.ne.s32.totalorder %s29, %s45
    %p47 = scmp.eq.s32.totalorder %s21, 0
    %p48 = por %p46, %p47
    %s49 = ssub.s32 %s15, %s22
    %p50 = scmp.eq.s32.totalorder %s49, 0
    %s52 = sadd.s32 %s51, 1
    %s53 = scalar_select %p50, %s51, %s52
    %p56 = pneg %p50
    %p57 = scmp.eq.s32.totalorder %s15, 1
    %p58 = por %p56, %p57
    %p59 = scmp.ne.s32.totalorder %s51, %s54
    %p60 = scmp.eq.s32.totalorder %s15, 0
    %p61 = por %p59, %p60
    %p62 = scmp.ne.s32.totalorder %s51, %s54
    %p63 = scmp.eq.s32.totalorder %s20, 1
    %p64 = por %p62, %p63
    %p65 = scmp.ne.s32.totalorder %s54, %s55
    %p66 = scmp.eq.s32.totalorder %s20, 0
    %p67 = por %p65, %p66
    %p68 = scmp.ne.s32.totalorder %s54, %s55
    %p69 = scmp.eq.s32.totalorder %s21, 1
    %p70 = por %p68, %p69
    %p72 = scmp.ne.s32.totalorder %s55, %s71
    %p73 = scmp.eq.s32.totalorder %s21, 0
    %p74 = por %p72, %p73
    %s76 = sadd.s32 %s75, 1
    %p79 = scmp.eq.s32.totalorder %s15, 1
    %p80 = scmp.ne.s32.totalorder %s75, %s77
    %p81 = scmp.eq.s32.totalorder %s15, 0
    %p82 = por %p80, %p81
    %p83 = scmp.ne.s32.totalorder %s75, %s77
    %p84 = scmp.eq.s32.totalorder %s20, 1
    %p85 = por %p83, %p84
    %p86 = scmp.ne.s32.totalorder %s77, %s78
    %p87 = scmp.eq.s32.totalorder %s20, 0
    %p88 = por %p86, %p87
    %p89 = scmp.ne.s32.totalorder %s77, %s78
    %p90 = scmp.eq.s32.totalorder %s21, 1
    %p91 = por %p89, %p90
    %p93 = scmp.ne.s32.totalorder %s78, %s92
    %p94 = scmp.eq.s32.totalorder %s21, 0
    %p95 = por %p93, %p94
    %s97 = sadd.s32 %s96, 1
    %p100 = scmp.eq.s32.totalorder %s15, 1
    %p101 = scmp.ne.s32.totalorder %s96, %s98
    %p102 = scmp.eq.s32.totalorder %s15, 0
    %p103 = por %p101, %p102
    %p104 = scmp.ne.s32.totalorder %s96, %s98
    %p105 = scmp.eq.s32.totalorder %s20, 1
    %p106 = por %p104, %p105
    %p107 = scmp.ne.s32.totalorder %s98, %s99
    %p108 = scmp.eq.s32.totalorder %s20, 0
    %p109 = por %p107, %p108
    %p110 = scmp.ne.s32.totalorder %s98, %s99
    %p111 = scmp.eq.s32.totalorder %s21, 1
    %p112 = por %p110, %p111
    %p114 = scmp.ne.s32.totalorder %s99, %s113
    %p115 = scmp.eq.s32.totalorder %s21, 0
    %p116 = por %p114, %p115
    %s118 = sadd.s32 %s117, 1
    %p121 = scmp.eq.s32.totalorder %s15, 1
    %p122 = scmp.ne.s32.totalorder %s117, %s119
    %p123 = scmp.eq.s32.totalorder %s15, 0
    %p124 = por %p122, %p123
    %p125 = scmp.ne.s32.totalorder %s117, %s119
    %p126 = scmp.eq.s32.totalorder %s20, 1
    %p127 = por %p125, %p126
    %p128 = scmp.ne.s32.totalorder %s119, %s120
    %p129 = scmp.eq.s32.totalorder %s20, 0
    %p130 = por %p128, %p129
    %p131 = scmp.ne.s32.totalorder %s119, %s120
    %p132 = scmp.eq.s32.totalorder %s21, 1
    %p133 = por %p131, %p132
    %p135 = scmp.ne.s32.totalorder %s120, %s134
    %p136 = scmp.eq.s32.totalorder %s21, 0
    %p137 = por %p135, %p136
    %s139 = sadd.s32 %s138, 1
    %p142 = scmp.eq.s32.totalorder %s15, 1
    %p143 = scmp.ne.s32.totalorder %s138, %s140
    %p144 = scmp.eq.s32.totalorder %s15, 0
    %p145 = por %p143, %p144
    %p146 = scmp.ne.s32.totalorder %s138, %s140
    %p147 = scmp.eq.s32.totalorder %s20, 1
    %p148 = por %p146, %p147
    %p149 = scmp.ne.s32.totalorder %s140, %s141
    %p150 = scmp.eq.s32.totalorder %s20, 0
    %p151 = por %p149, %p150
    %p152 = scmp.ne.s32.totalorder %s140, %s141
    %p153 = scmp.eq.s32.totalorder %s21, 1
    %p154 = por %p152, %p153
    %p156 = scmp.ne.s32.totalorder %s141, %s155
    %p157 = scmp.eq.s32.totalorder %s21, 0
    %p158 = por %p156, %p157
    %s160 = sadd.s32 %s159, 1
    %p163 = scmp.eq.s32.totalorder %s15, 1
    %p164 = scmp.ne.s32.totalorder %s159, %s161
    %p165 = scmp.eq.s32.totalorder %s15, 0
    %p166 = por %p164, %p165
    %p167 = scmp.ne.s32.totalorder %s159, %s161
    %p168 = scmp.eq.s32.totalorder %s20, 1
    %p169 = por %p167, %p168
    %p170 = scmp.ne.s32.totalorder %s161, %s162
    %p171 = scmp.eq.s32.totalorder %s20, 0
    %p172 = por %p170, %p171
    %p173 = scmp.ne.s32.totalorder %s161, %s162
    %p174 = scmp.eq.s32.totalorder %s21, 1
    %p175 = por %p173, %p174
    %p177 = scmp.ne.s32.totalorder %s162, %s176
    %p178 = scmp.eq.s32.totalorder %s21, 0
    %p179 = por %p177, %p178
    %s181 = sadd.s32 %s180, 1
    %p184 = scmp.eq.s32.totalorder %s15, 1
    %p185 = scmp.ne.s32.totalorder %s180, %s182
    %p186 = scmp.eq.s32.totalorder %s15, 0
    %p187 = por %p185, %p186
    %p188 = scmp.ne.s32.totalorder %s180, %s182
    %p189 = scmp.eq.s32.totalorder %s20, 1
    %p190 = por %p188, %p189
    %p191 = scmp.ne.s32.totalorder %s182, %s183
    %p192 = scmp.eq.s32.totalorder %s20, 0
    %p193 = por %p191, %p192
    %p194 = scmp.ne.s32.totalorder %s182, %s183
    %p195 = scmp.eq.s32.totalorder %s21, 1
    %p196 = por %p194, %p195
    %p198 = scmp.ne.s32.totalorder %s183, %s197
    %p199 = scmp.eq.s32.totalorder %s21, 0
    %p200 = por %p198, %p199
    %s202 = sadd.s32 %s201, 1
    %p205 = scmp.eq.s32.totalorder %s15, 1
    %p206 = scmp.ne.s32.totalorder %s201, %s203
    %p207 = scmp.eq.s32.totalorder %s15, 0
    %p208 = por %p206, %p207
    %p209 = scmp.ne.s32.totalorder %s201, %s203
    %p210 = scmp.eq.s32.totalorder %s20, 1
    %p211 = por %p209, %p210
    %p212 = scmp.ne.s32.totalorder %s203, %s204
    %p213 = scmp.eq.s32.totalorder %s20, 0
    %p214 = por %p212, %p213
    %p215 = scmp.ne.s32.totalorder %s203, %s204
    %p216 = scmp.eq.s32.totalorder %s21, 1
    %p217 = por %p215, %p216
    %p219 = scmp.ne.s32.totalorder %s204, %s218
    %p220 = scmp.eq.s32.totalorder %s21, 0
    %p221 = por %p219, %p220
    %s222 = ssub.s32 %s15, %s22
    %p223 = scmp.eq.s32.totalorder %s222, 0
    %s225 = sadd.s32 %s224, 1
    %s226 = scalar_select %p223, %s224, %s225
    %p229 = pneg %p223
    %p230 = scmp.eq.s32.totalorder %s15, 1
    %p231 = por %p229, %p230
    %p232 = scmp.ne.s32.totalorder %s224, %s227
    %p233 = scmp.eq.s32.totalorder %s15, 0
    %p234 = por %p232, %p233
    %p235 = scmp.ne.s32.totalorder %s224, %s227
    %p236 = scmp.eq.s32.totalorder %s20, 1
    %p237 = por %p235, %p236
    %p238 = scmp.ne.s32.totalorder %s227, %s228
    %p239 = scmp.eq.s32.totalorder %s20, 0
    %p240 = por %p238, %p239
    %p241 = scmp.ne.s32.totalorder %s227, %s228
    %p242 = scmp.eq.s32.totalorder %s21, 1
    %p243 = por %p241, %p242
    %p245 = scmp.ne.s32.totalorder %s228, %s244
    %p246 = scmp.eq.s32.totalorder %s21, 0
    %p247 = por %p245, %p246
    %p248 = scmp.le.s32.totalorder 1, %s15
    %p249 = scmp.lt.s32.totalorder %s15, 3
    %p250 = pnand %p248, %p249
    %p251 = pneg %p250
    // Predicated region
    $region9: #{siamfc_head_loc.1} parent=5 // pred_check
      _
    $region10: #{siamfc_head_loc.1} parent=5 // pred_check_branch
      %253 = sbr.rel (%p250) target = $region12
    $region11: #{siamfc_head_loc.1} parent=5 // pred_region
      %s254 = ssub.s32 %s15, 1
      // Predicated region
      $region13: #{siamfc_head_loc.1} parent=11 // pred_check
        %p255 = pneg %p88
      $region14: #{siamfc_head_loc.1} parent=11 // pred_check_branch
        %257 = sbr.rel (%p255) target = $region16
      $region15: #{siamfc_head_loc.1} parent=11 // pred_region
        _
      $region16: #{siamfc_head_loc.1} parent=11 // pred_fallthru
        _
      // Predicated region
      $region17: #{siamfc_head_loc.1} parent=11 // pred_check
        %p258 = pneg %p109
      $region18: #{siamfc_head_loc.1} parent=11 // pred_check_branch
        %260 = sbr.rel (%p258) target = $region20
      $region19: #{siamfc_head_loc.1} parent=11 // pred_region
        _
      $region20: #{siamfc_head_loc.1} parent=11 // pred_fallthru
        _
      // Predicated region
      $region21: #{siamfc_head_loc.1} parent=11 // pred_check
        %p261 = pneg %p130
      $region22: #{siamfc_head_loc.1} parent=11 // pred_check_branch
        %263 = sbr.rel (%p261) target = $region24
      $region23: #{siamfc_head_loc.1} parent=11 // pred_region
        _
      $region24: #{siamfc_head_loc.1} parent=11 // pred_fallthru
        _
      // Predicated region
      $region25: #{siamfc_head_loc.1} parent=11 // pred_check
        %p264 = pneg %p151
      $region26: #{siamfc_head_loc.1} parent=11 // pred_check_branch
        %266 = sbr.rel (%p264) target = $region28
      $region27: #{siamfc_head_loc.1} parent=11 // pred_region
        _
      $region28: #{siamfc_head_loc.1} parent=11 // pred_fallthru
        _
      // Predicated region
      $region29: #{siamfc_head_loc.1} parent=11 // pred_check
        %p267 = pneg %p172
      $region30: #{siamfc_head_loc.1} parent=11 // pred_check_branch
        %269 = sbr.rel (%p267) target = $region32
      $region31: #{siamfc_head_loc.1} parent=11 // pred_region
        _
      $region32: #{siamfc_head_loc.1} parent=11 // pred_fallthru
        _
      // Predicated region
      $region33: #{siamfc_head_loc.1} parent=11 // pred_check
        %p270 = pneg %p193
      $region34: #{siamfc_head_loc.1} parent=11 // pred_check_branch
        %272 = sbr.rel (%p270) target = $region36
      $region35: #{siamfc_head_loc.1} parent=11 // pred_region
        _
      $region36: #{siamfc_head_loc.1} parent=11 // pred_fallthru
        _
      // Predicated region
      $region37: #{siamfc_head_loc.1} parent=11 // pred_check
        %p273 = pneg %p214
      $region38: #{siamfc_head_loc.1} parent=11 // pred_check_branch
        %275 = sbr.rel (%p273) target = $region40
      $region39: #{siamfc_head_loc.1} parent=11 // pred_region
        _
      $region40: #{siamfc_head_loc.1} parent=11 // pred_fallthru
        _
    $region12: #{siamfc_head_loc.1} parent=5 // pred_fallthru
      _
    %p276 = scmp.lt.s32.totalorder %s15, 2
    // Predicated region
    $region41: #{siamfc_head_loc.1} parent=5 // pred_check
      %p277 = pneg %p276
    $region42: #{siamfc_head_loc.1} parent=5 // pred_check_branch
      %279 = sbr.rel (%p277) target = $region44
    $region43: #{siamfc_head_loc.1} parent=5 // pred_region
      // Predicated region
      $region45: #{siamfc_head_loc.1} parent=43 // pred_check
        %p280 = pneg %p35
      $region46: #{siamfc_head_loc.1} parent=43 // pred_check_branch
        %282 = sbr.rel (%p280) target = $region48
      $region47: #{siamfc_head_loc.1} parent=43 // pred_region
        %p283 = scmp.lt.s32.totalorder %s15, 1
        %s284 = scalar_select %p283, %s15, 1
        %s285 = smul.addr %s284, 4
        %s286 = smul.addr %s285, 8
        %s287 = scalar_lea.vmem %s0, %s286
      $region48: #{siamfc_head_loc.1} parent=43 // pred_fallthru
        _
      // Predicated region
      $region49: #{siamfc_head_loc.1} parent=43 // pred_check
        %p288 = pneg %p61
      $region50: #{siamfc_head_loc.1} parent=43 // pred_check_branch
        %290 = sbr.rel (%p288) target = $region52
      $region51: #{siamfc_head_loc.1} parent=43 // pred_region
        %p291 = scmp.lt.s32.totalorder %s15, 1
        %s292 = scalar_select %p291, %s15, 1
        %s293 = smul.addr %s292, 32
        %s294 = smul.addr %s293, 8
        %s295 = scalar_lea.vmem %s1, %s294
      $region52: #{siamfc_head_loc.1} parent=43 // pred_fallthru
        _
    $region44: #{siamfc_head_loc.1} parent=5 // pred_fallthru
      _
    %p296 = scmp.le.s32.totalorder 1, %s15
    %p297 = scmp.lt.s32.totalorder %s15, 3
    %p298 = pnand %p296, %p297
    %p299 = pneg %p298
    // Predicated region
    $region53: #{siamfc_head_loc.1} parent=5 // pred_check
      _
    $region54: #{siamfc_head_loc.1} parent=5 // pred_check_branch
      %301 = sbr.rel (%p298) target = $region56
    $region55: #{siamfc_head_loc.1} parent=5 // pred_region
      %s302 = ssub.s32 %s15, 1
      %p303 = scmp.lt.s32.totalorder %s20, 1
      %s304 = scalar_select %p303, %s20, 1
      %s305 = smul.addr %s304, 4
      %s306 = smul.addr %s305, 8
      %s307 = scalar_lea.vmem %s0, %s306
      %p308 = pneg %p41
      %p309 = pneg %p38
      %p310 = scmp.lt.s32.totalorder %s20, 1
      %s311 = scalar_select %p310, %s20, 1
      %s312 = smul.addr %s311, 32
      %s313 = smul.addr %s312, 8
      %s314 = scalar_lea.vmem %s1, %s313
      %p315 = pneg %p67
      %p316 = pneg %p64
      %p317 = pneg %p88
      %p318 = pneg %p85
      %p319 = pneg %p109
      %p320 = pneg %p106
      %p321 = pneg %p130
      %p322 = pneg %p127
      %p323 = pneg %p151
      %p324 = pneg %p148
      %p325 = pneg %p172
      %p326 = pneg %p169
      %p327 = pneg %p193
      %p328 = pneg %p190
      %p329 = pneg %p214
      %p330 = pneg %p211
      %p331 = pneg %p240
      %p332 = pneg %p237
      %p333 = scmp.lt.s32.totalorder %s20, 1
      %s334 = scalar_select %p333, %s20, 1
      %s335 = smul.addr %s334, 3
      %s336 = smul.addr %s335, 2
      %s337 = scalar_lea.vmem %s9, %s336
      %p338 = scmp.lt.s32.totalorder %s20, 1
      %s339 = scalar_select %p338, %s20, 1
      %s340 = smul.addr %s339, 4
      %s341 = smul.addr %s340, 8
      %s342 = scalar_lea.vmem %s0, %s341
      %p343 = scmp.lt.s32.totalorder %s20, 1
      %s344 = scalar_select %p343, %s20, 1
      %s345 = smul.addr %s344, 32
      %s346 = smul.addr %s345, 8
      %s347 = scalar_lea.vmem %s1, %s346
      %p348 = scmp.lt.s32.totalorder %s20, 1
      %s349 = scalar_select %p348, %s20, 1
      %s350 = smul.addr %s349, 3
      %s351 = smul.addr %s350, 2
      %s352 = scalar_lea.vmem %s9, %s351
      %v353 = vld [vmem:[%s342] sm:$0xff]
      %v354 = vld [vmem:[%s342 + $0x8] sm:$0xff]
      %v355 = vld [vmem:[%s342 + $0x10] sm:$0xff]
      %v356 = vld [vmem:[%s342 + $0x18] sm:$0x1]
      %v357 = vld [vmem:[%s2] sm:$0xff]
      %v358 = vld [vmem:[%s2 + $0x8] sm:$0xff]
      %v359 = vld [vmem:[%s2 + $0x10] sm:$0xff]
      %v360 = vld [vmem:[%s2 + $0x18] sm:$0xff]
      %v361 = vld [vmem:[%s2 + $0x20] sm:$0xff]
      %v362 = vld [vmem:[%s2 + $0x28] sm:$0xff]
      %v363 = vld [vmem:[%s2 + $0x30] sm:$0xff]
      %v364 = vld [vmem:[%s2 + $0x38] sm:$0xff]
      %v365 = vld [vmem:[%s4] sm:$0x1]
      %v367 = vperm.slane %v365, 0
      %vm369 = vcmask 523264
      %v371 = vsel %vm369, %v353, 0
      %v374 = vsel %vm369, %v354, 0
      %v377 = vsel %vm369, %v355, 0
      %v380 = vsel %vm369, %v356, 0
      %382 = vmatpush.msra.mxu0 0.0
      %383 = vmatpush.msra.mxu0 0.0
      %384 = vmatpush.msra.mxu0 0.0
      %385 = vmatpush.msra.mxu0 0.0
      %386 = vmatpush.msra.mxu0 0.0
      %387 = vmatpush.msra.mxu0 0.0
      %388 = vmatpush.msra.mxu0 0.0
      %389 = vmatpush.msra.mxu0 0.0
      %390 = vmatpush.msra.mxu0 %v364
      %391 = vmatpush.msra.mxu0 %v363
      %392 = vmatpush.msra.mxu0 %v362
      %393 = vmatpush.msra.mxu0 %v361
      %394 = vmatpush.msra.mxu0 %v360
      %395 = vmatpush.msra.mxu0 %v359
      %396 = vmatpush.msra.mxu0 %v358
      %397 = vmatpush.msra.mxu0 %v357
      %398 = vmatmul.f32.gmra.mxu0 %v371
      %v399 = vpop.f32.mrf.mxu0
      %v400 = vadd.f32 %v367, %v399
      %401 = vmatmul.f32.gmra.mxu0 %v374
      %v402 = vpop.f32.mrf.mxu0
      %v403 = vadd.f32 %v367, %v402
      %404 = vmatmul.f32.gmra.mxu0 %v377
      %v405 = vpop.f32.mrf.mxu0
      %v406 = vadd.f32 %v367, %v405
      %407 = vmatmul.f32.gmra.mxu0 %v380
      %v408 = vpop.f32.mrf.mxu0
      %v409 = vadd.f32 %v367, %v408
      %410 = vdwg.mxu0
      %v411 = vmul.f32 %v400, 0.01
      %v412 = vmul.f32 %v403, 0.01
      %v413 = vmul.f32 %v406, 0.01
      %v414 = vmul.f32 %v409, 0.01
      %v415 = vld [vmem:[%s3] sm:$0xff]
      %v416 = vld [vmem:[%s3 + $0x8] sm:$0xff]
      %v417 = vld [vmem:[%s3 + $0x10] sm:$0xff]
      %v418 = vld [vmem:[%s3 + $0x18] sm:$0xff]
      %v419 = vld [vmem:[%s3 + $0x20] sm:$0xff]
      %v420 = vld [vmem:[%s3 + $0x28] sm:$0xff]
      %v421 = vld [vmem:[%s3 + $0x30] sm:$0xff]
      %v422 = vld [vmem:[%s3 + $0x38] sm:$0xff]
      %v423 = vld [vmem:[%s5] sm:$0x1]
      %v425 = vperm.slane %v423, 0
      %427 = vmatpush.msra.mxu0 0.0
      %428 = vmatpush.msra.mxu0 0.0
      %429 = vmatpush.msra.mxu0 0.0
      %430 = vmatpush.msra.mxu0 0.0
      %431 = vmatpush.msra.mxu0 0.0
      %432 = vmatpush.msra.mxu0 0.0
      %433 = vmatpush.msra.mxu0 0.0
      %434 = vmatpush.msra.mxu0 0.0
      %435 = vmatpush.msra.mxu0 %v422
      %436 = vmatpush.msra.mxu0 %v421
      %437 = vmatpush.msra.mxu0 %v420
      %438 = vmatpush.msra.mxu0 %v419
      %439 = vmatpush.msra.mxu0 %v418
      %440 = vmatpush.msra.mxu0 %v417
      %441 = vmatpush.msra.mxu0 %v416
      %442 = vmatpush.msra.mxu0 %v415
      %443 = vmatmul.f32.gmra.mxu0 %v371
      %v444 = vpop.f32.mrf.mxu0
      %v445 = vadd.f32 %v425, %v444
      %446 = vmatmul.f32.gmra.mxu0 %v374
      %v447 = vpop.f32.mrf.mxu0
      %v448 = vadd.f32 %v425, %v447
      %449 = vmatmul.f32.gmra.mxu0 %v377
      %v450 = vpop.f32.mrf.mxu0
      %v451 = vadd.f32 %v425, %v450
      %452 = vmatmul.f32.gmra.mxu0 %v380
      %v453 = vpop.f32.mrf.mxu0
      %v454 = vadd.f32 %v425, %v453
      %455 = vdwg.mxu0
      %v456 = vmul.f32 %v445, 0.01
      %v457 = vmul.f32 %v448, 0.01
      %v458 = vmul.f32 %v451, 0.01
      %v459 = vmul.f32 %v454, 0.01
      %v460 = vld [vmem:[%s6] sm:$0xff]
      %v461 = vld [vmem:[%s6 + $0x8] sm:$0xff]
      %v462 = vld [vmem:[%s6 + $0x10] sm:$0xff]
      %v463 = vld [vmem:[%s6 + $0x18] sm:$0xff]
      %v464 = vld [vmem:[%s6 + $0x20] sm:$0xff]
      %v465 = vld [vmem:[%s6 + $0x28] sm:$0xff]
      %v466 = vld [vmem:[%s6 + $0x30] sm:$0xff]
      %v467 = vld [vmem:[%s6 + $0x38] sm:$0xff]
      %v468 = vld [vmem:[%s347] sm:$0xff]
      %v469 = vld [vmem:[%s347 + $0x8] sm:$0xff]
      %v470 = vld [vmem:[%s347 + $0x10] sm:$0xff]
      %v471 = vld [vmem:[%s347 + $0x18] sm:$0xff]
      %v472 = vld [vmem:[%s347 + $0x20] sm:$0xff]
      %v473 = vld [vmem:[%s347 + $0x28] sm:$0xff]
      %v474 = vld [vmem:[%s347 + $0x30] sm:$0xff]
      %v475 = vld [vmem:[%s347 + $0x38] sm:$0xff]
      %v476 = vld [vmem:[%s347 + $0x40] sm:$0xff]
      %v477 = vld [vmem:[%s347 + $0x48] sm:$0xff]
      %v478 = vld [vmem:[%s347 + $0x50] sm:$0xff]
      %v479 = vld [vmem:[%s347 + $0x58] sm:$0xff]
      %v480 = vld [vmem:[%s347 + $0x60] sm:$0xff]
      %v481 = vld [vmem:[%s347 + $0x68] sm:$0xff]
      %v482 = vld [vmem:[%s347 + $0x70] sm:$0xff]
      %v483 = vld [vmem:[%s347 + $0x78] sm:$0xff]
      %v484 = vld [vmem:[%s347 + $0x80] sm:$0xff]
      %v485 = vld [vmem:[%s347 + $0x88] sm:$0xff]
      %v486 = vld [vmem:[%s347 + $0x90] sm:$0xff]
      %v487 = vld [vmem:[%s347 + $0x98] sm:$0xff]
      %v488 = vld [vmem:[%s347 + $0xa0] sm:$0xff]
      %v489 = vld [vmem:[%s347 + $0xa8] sm:$0xff]
      %v490 = vld [vmem:[%s347 + $0xb0] sm:$0xff]
      %v491 = vld [vmem:[%s347 + $0xb8] sm:$0xff]
      %v492 = vld [vmem:[%s347 + $0xc0] sm:$0xff]
      %v493 = vld [vmem:[%s347 + $0xc8] sm:$0xff]
      %v494 = vld [vmem:[%s347 + $0xd0] sm:$0xff]
      %v495 = vld [vmem:[%s347 + $0xd8] sm:$0xff]
      %v496 = vld [vmem:[%s347 + $0xe0] sm:$0xff]
      %v497 = vld [vmem:[%s347 + $0xe8] sm:$0xff]
      %v498 = vld [vmem:[%s347 + $0xf0] sm:$0xff]
      %v499 = vld [vmem:[%s347 + $0xf8] sm:$0xff]
      %v500 = vld [vmem:[%s7] sm:$0xff]
      %v501 = vld [vmem:[%s7 + $0x8] sm:$0xff]
      %v502 = vld [vmem:[%s7 + $0x10] sm:$0xff]
      %v503 = vld [vmem:[%s7 + $0x18] sm:$0xff]
      %v504 = vld [vmem:[%s7 + $0x20] sm:$0xff]
      %v505 = vld [vmem:[%s7 + $0x28] sm:$0xff]
      %v506 = vld [vmem:[%s7 + $0x30] sm:$0xff]
      %v507 = vld [vmem:[%s7 + $0x38] sm:$0xff]
      %v508 = vld [vmem:[%s8] sm:$0xf]
      %510 = vset.pattern.permute.xlu0 0
      %511 = vperm.xlu0 %510, %v500
      %v512 = vpop.permute.xlu0 %511
      %515 = vset.pattern.permute.xlu0 0
      %516 = vperm.xlu0 %515, %v501
      %v517 = vpop.permute.xlu0 %516
      %520 = vset.pattern.permute.xlu0 0
      %521 = vperm.xlu0 %520, %v502
      %v522 = vpop.permute.xlu0 %521
      %525 = vset.pattern.permute.xlu0 0
      %526 = vperm.xlu0 %525, %v503
      %v527 = vpop.permute.xlu0 %526
      %530 = vset.pattern.permute.xlu0 0
      %531 = vperm.xlu0 %530, %v504
      %v532 = vpop.permute.xlu0 %531
      %535 = vset.pattern.permute.xlu0 0
      %536 = vperm.xlu0 %535, %v505
      %v537 = vpop.permute.xlu0 %536
      %540 = vset.pattern.permute.xlu0 0
      %541 = vperm.xlu0 %540, %v506
      %v542 = vpop.permute.xlu0 %541
      %545 = vset.pattern.permute.xlu0 0
      %546 = vperm.xlu0 %545, %v507
      %v547 = vpop.permute.xlu0 %546
      %v550 = vperm.slane %v508, 0
      %v551 = vperm.slane %v508, 1
      %v552 = vperm.slane %v508, 2
      %v553 = vperm.slane %v508, 3
      %v558 = vmul.f32 %v512, %v550
      %v559 = vmul.f32 %v512, %v551
      %v560 = vmul.f32 %v512, %v552
      %v561 = vmul.f32 %v512, %v553
      %v562 = vmul.f32 %v517, %v550
      %v563 = vmul.f32 %v517, %v551
      %v564 = vmul.f32 %v517, %v552
      %v565 = vmul.f32 %v517, %v553
      %v566 = vmul.f32 %v522, %v550
      %v567 = vmul.f32 %v522, %v551
      %v568 = vmul.f32 %v522, %v552
      %v569 = vmul.f32 %v522, %v553
      %v570 = vmul.f32 %v527, %v550
      %v571 = vmul.f32 %v527, %v551
      %v572 = vmul.f32 %v527, %v552
      %v573 = vmul.f32 %v527, %v553
      %v574 = vmul.f32 %v532, %v550
      %v575 = vmul.f32 %v532, %v551
      %v576 = vmul.f32 %v532, %v552
      %v577 = vmul.f32 %v532, %v553
      %v578 = vmul.f32 %v537, %v550
      %v579 = vmul.f32 %v537, %v551
      %v580 = vmul.f32 %v537, %v552
      %v581 = vmul.f32 %v537, %v553
      %v582 = vmul.f32 %v542, %v550
      %v583 = vmul.f32 %v542, %v551
      %v584 = vmul.f32 %v542, %v552
      %v585 = vmul.f32 %v542, %v553
      %v586 = vmul.f32 %v547, %v550
      %v587 = vmul.f32 %v547, %v551
      %v588 = vmul.f32 %v547, %v552
      %v589 = vmul.f32 %v547, %v553
      %v591 = vsel %vm369, %v460, 0
      %v594 = vsel %vm369, %v461, 0
      %v597 = vsel %vm369, %v462, 0
      %v600 = vsel %vm369, %v463, 0
      %v603 = vsel %vm369, %v464, 0
      %v606 = vsel %vm369, %v465, 0
      %v609 = vsel %vm369, %v466, 0
      %v612 = vsel %vm369, %v467, 0
      %614 = vmatpush.msra.mxu0 0.0
      %615 = vmatpush.msra.mxu0 0.0
      %616 = vmatpush.msra.mxu0 0.0
      %617 = vmatpush.msra.mxu0 0.0
      %618 = vmatpush.msra.mxu0 0.0
      %619 = vmatpush.msra.mxu0 0.0
      %620 = vmatpush.msra.mxu0 0.0
      %621 = vmatpush.msra.mxu0 0.0
      %622 = vmatpush.msra.mxu0 %v496
      %623 = vmatpush.msra.mxu0 %v492
      %624 = vmatpush.msra.mxu0 %v488
      %625 = vmatpush.msra.mxu0 %v484
      %626 = vmatpush.msra.mxu0 %v480
      %627 = vmatpush.msra.mxu0 %v476
      %628 = vmatpush.msra.mxu0 %v472
      %629 = vmatpush.msra.mxu0 %v468
      %630 = vmatmul.f32.gmra.mxu0 %v591
      %v631 = vpop.f32.mrf.mxu0
      %v632 = vadd.f32 %v558, %v631
      %633 = vmatmul.f32.gmra.mxu0 %v594
      %v634 = vpop.f32.mrf.mxu0
      %v635 = vadd.f32 %v562, %v634
      %636 = vmatmul.f32.gmra.mxu0 %v597
      %v637 = vpop.f32.mrf.mxu0
      %v638 = vadd.f32 %v566, %v637
      %639 = vmatmul.f32.gmra.mxu0 %v600
      %v640 = vpop.f32.mrf.mxu0
      %v641 = vadd.f32 %v570, %v640
      %642 = vmatmul.f32.gmra.mxu0 %v603
      %v643 = vpop.f32.mrf.mxu0
      %v644 = vadd.f32 %v574, %v643
      %645 = vmatmul.f32.gmra.mxu0 %v606
      %v646 = vpop.f32.mrf.mxu0
      %v647 = vadd.f32 %v578, %v646
      %648 = vmatmul.f32.gmra.mxu0 %v609
      %v649 = vpop.f32.mrf.mxu0
      %v650 = vadd.f32 %v582, %v649
      %651 = vmatmul.f32.gmra.mxu0 %v612
      %v652 = vpop.f32.mrf.mxu0
      %v653 = vadd.f32 %v586, %v652
      %654 = vdwg.mxu0
      %655 = vmatpush.msra.mxu0 0.0
      %656 = vmatpush.msra.mxu0 0.0
      %657 = vmatpush.msra.mxu0 0.0
      %658 = vmatpush.msra.mxu0 0.0
      %659 = vmatpush.msra.mxu0 0.0
      %660 = vmatpush.msra.mxu0 0.0
      %661 = vmatpush.msra.mxu0 0.0
      %662 = vmatpush.msra.mxu0 0.0
      %663 = vmatpush.msra.mxu0 %v497
      %664 = vmatpush.msra.mxu0 %v493
      %665 = vmatpush.msra.mxu0 %v489
      %666 = vmatpush.msra.mxu0 %v485
      %667 = vmatpush.msra.mxu0 %v481
      %668 = vmatpush.msra.mxu0 %v477
      %669 = vmatpush.msra.mxu0 %v473
      %670 = vmatpush.msra.mxu0 %v469
      %671 = vmatmul.f32.gmra.mxu0 %v591
      %v672 = vpop.f32.mrf.mxu0
      %v673 = vadd.f32 %v559, %v672
      %674 = vmatmul.f32.gmra.mxu0 %v594
      %v675 = vpop.f32.mrf.mxu0
      %v676 = vadd.f32 %v563, %v675
      %677 = vmatmul.f32.gmra.mxu0 %v597
      %v678 = vpop.f32.mrf.mxu0
      %v679 = vadd.f32 %v567, %v678
      %680 = vmatmul.f32.gmra.mxu0 %v600
      %v681 = vpop.f32.mrf.mxu0
      %v682 = vadd.f32 %v571, %v681
      %683 = vmatmul.f32.gmra.mxu0 %v603
      %v684 = vpop.f32.mrf.mxu0
      %v685 = vadd.f32 %v575, %v684
      %686 = vmatmul.f32.gmra.mxu0 %v606
      %v687 = vpop.f32.mrf.mxu0
      %v688 = vadd.f32 %v579, %v687
      %689 = vmatmul.f32.gmra.mxu0 %v609
      %v690 = vpop.f32.mrf.mxu0
      %v691 = vadd.f32 %v583, %v690
      %692 = vmatmul.f32.gmra.mxu0 %v612
      %v693 = vpop.f32.mrf.mxu0
      %v694 = vadd.f32 %v587, %v693
      %695 = vdwg.mxu0
      %696 = vmatpush.msra.mxu0 0.0
      %697 = vmatpush.msra.mxu0 0.0
      %698 = vmatpush.msra.mxu0 0.0
      %699 = vmatpush.msra.mxu0 0.0
      %700 = vmatpush.msra.mxu0 0.0
      %701 = vmatpush.msra.mxu0 0.0
      %702 = vmatpush.msra.mxu0 0.0
      %703 = vmatpush.msra.mxu0 0.0
      %704 = vmatpush.msra.mxu0 %v498
      %705 = vmatpush.msra.mxu0 %v494
      %706 = vmatpush.msra.mxu0 %v490
      %707 = vmatpush.msra.mxu0 %v486
      %708 = vmatpush.msra.mxu0 %v482
      %709 = vmatpush.msra.mxu0 %v478
      %710 = vmatpush.msra.mxu0 %v474
      %711 = vmatpush.msra.mxu0 %v470
      %712 = vmatmul.f32.gmra.mxu0 %v591
      %v713 = vpop.f32.mrf.mxu0
      %v714 = vadd.f32 %v560, %v713
      %715 = vmatmul.f32.gmra.mxu0 %v594
      %v716 = vpop.f32.mrf.mxu0
      %v717 = vadd.f32 %v564, %v716
      %718 = vmatmul.f32.gmra.mxu0 %v597
      %v719 = vpop.f32.mrf.mxu0
      %v720 = vadd.f32 %v568, %v719
      %721 = vmatmul.f32.gmra.mxu0 %v600
      %v722 = vpop.f32.mrf.mxu0
      %v723 = vadd.f32 %v572, %v722
      %724 = vmatmul.f32.gmra.mxu0 %v603
      %v725 = vpop.f32.mrf.mxu0
      %v726 = vadd.f32 %v576, %v725
      %727 = vmatmul.f32.gmra.mxu0 %v606
      %v728 = vpop.f32.mrf.mxu0
      %v729 = vadd.f32 %v580, %v728
      %730 = vmatmul.f32.gmra.mxu0 %v609
      %v731 = vpop.f32.mrf.mxu0
      %v732 = vadd.f32 %v584, %v731
      %733 = vmatmul.f32.gmra.mxu0 %v612
      %v734 = vpop.f32.mrf.mxu0
      %v735 = vadd.f32 %v588, %v734
      %736 = vdwg.mxu0
      %737 = vmatpush.msra.mxu0 0.0
      %738 = vmatpush.msra.mxu0 0.0
      %739 = vmatpush.msra.mxu0 0.0
      %740 = vmatpush.msra.mxu0 0.0
      %741 = vmatpush.msra.mxu0 0.0
      %742 = vmatpush.msra.mxu0 0.0
      %743 = vmatpush.msra.mxu0 0.0
      %744 = vmatpush.msra.mxu0 0.0
      %745 = vmatpush.msra.mxu0 %v499
      %746 = vmatpush.msra.mxu0 %v495
      %747 = vmatpush.msra.mxu0 %v491
      %748 = vmatpush.msra.mxu0 %v487
      %749 = vmatpush.msra.mxu0 %v483
      %750 = vmatpush.msra.mxu0 %v479
      %751 = vmatpush.msra.mxu0 %v475
      %752 = vmatpush.msra.mxu0 %v471
      %753 = vmatmul.f32.gmra.mxu0 %v591
      %v754 = vpop.f32.mrf.mxu0
      %v755 = vadd.f32 %v561, %v754
      %756 = vmatmul.f32.gmra.mxu0 %v594
      %v757 = vpop.f32.mrf.mxu0
      %v758 = vadd.f32 %v565, %v757
      %759 = vmatmul.f32.gmra.mxu0 %v597
      %v760 = vpop.f32.mrf.mxu0
      %v761 = vadd.f32 %v569, %v760
      %762 = vmatmul.f32.gmra.mxu0 %v600
      %v763 = vpop.f32.mrf.mxu0
      %v764 = vadd.f32 %v573, %v763
      %765 = vmatmul.f32.gmra.mxu0 %v603
      %v766 = vpop.f32.mrf.mxu0
      %v767 = vadd.f32 %v577, %v766
      %768 = vmatmul.f32.gmra.mxu0 %v606
      %v769 = vpop.f32.mrf.mxu0
      %v770 = vadd.f32 %v581, %v769
      %771 = vmatmul.f32.gmra.mxu0 %v609
      %v772 = vpop.f32.mrf.mxu0
      %v773 = vadd.f32 %v585, %v772
      %774 = vmatmul.f32.gmra.mxu0 %v612
      %v775 = vpop.f32.mrf.mxu0
      %v776 = vadd.f32 %v589, %v775
      %777 = vdwg.mxu0
      %v779 = vsel %vm369, %v411, 0
      %v782 = vsel %vm369, %v412, 0
      %v785 = vsel %vm369, %v413, 0
      %v788 = vsel %vm369, %v414, 0
      %790 = vmatpush.msra.mxu0 0.0
      %791 = vmatpush.msra.mxu0 0.0
      %792 = vmatpush.msra.mxu0 0.0
      %793 = vmatpush.msra.mxu0 0.0
      %794 = vmatpush.msra.mxu0 0.0
      %795 = vmatpush.msra.mxu0 0.0
      %796 = vmatpush.msra.mxu0 0.0
      %797 = vmatpush.msra.mxu0 0.0
      %798 = vmatpush.msra.mxu0 %v653
      %799 = vmatpush.msra.mxu0 %v650
      %800 = vmatpush.msra.mxu0 %v647
      %801 = vmatpush.msra.mxu0 %v644
      %802 = vmatpush.msra.mxu0 %v641
      %803 = vmatpush.msra.mxu0 %v638
      %804 = vmatpush.msra.mxu0 %v635
      %805 = vmatpush.msra.mxu0 %v632
      %806 = vmatmul.f32.gmra.mxu0 %v779
      %v807 = vpop.f32.mrf.mxu0
      %v808 = vadd.f32 0.0, %v807
      %809 = vmatmul.f32.gmra.mxu0 %v782
      %v810 = vpop.f32.mrf.mxu0
      %v811 = vadd.f32 0.0, %v810
      %812 = vmatmul.f32.gmra.mxu0 %v785
      %v813 = vpop.f32.mrf.mxu0
      %v814 = vadd.f32 0.0, %v813
      %815 = vmatmul.f32.gmra.mxu0 %v788
      %v816 = vpop.f32.mrf.mxu0
      %v817 = vadd.f32 0.0, %v816
      %818 = vdwg.mxu0
      %819 = vmatpush.msra.mxu0 0.0
      %820 = vmatpush.msra.mxu0 0.0
      %821 = vmatpush.msra.mxu0 0.0
      %822 = vmatpush.msra.mxu0 0.0
      %823 = vmatpush.msra.mxu0 0.0
      %824 = vmatpush.msra.mxu0 0.0
      %825 = vmatpush.msra.mxu0 0.0
      %826 = vmatpush.msra.mxu0 0.0
      %827 = vmatpush.msra.mxu0 %v694
      %828 = vmatpush.msra.mxu0 %v691
      %829 = vmatpush.msra.mxu0 %v688
      %830 = vmatpush.msra.mxu0 %v685
      %831 = vmatpush.msra.mxu0 %v682
      %832 = vmatpush.msra.mxu0 %v679
      %833 = vmatpush.msra.mxu0 %v676
      %834 = vmatpush.msra.mxu0 %v673
      %835 = vmatmul.f32.gmra.mxu0 %v779
      %v836 = vpop.f32.mrf.mxu0
      %v837 = vadd.f32 0.0, %v836
      %838 = vmatmul.f32.gmra.mxu0 %v782
      %v839 = vpop.f32.mrf.mxu0
      %v840 = vadd.f32 0.0, %v839
      %841 = vmatmul.f32.gmra.mxu0 %v785
      %v842 = vpop.f32.mrf.mxu0
      %v843 = vadd.f32 0.0, %v842
      %844 = vmatmul.f32.gmra.mxu0 %v788
      %v845 = vpop.f32.mrf.mxu0
      %v846 = vadd.f32 0.0, %v845
      %847 = vdwg.mxu0
      %848 = vmatpush.msra.mxu0 0.0
      %849 = vmatpush.msra.mxu0 0.0
      %850 = vmatpush.msra.mxu0 0.0
      %851 = vmatpush.msra.mxu0 0.0
      %852 = vmatpush.msra.mxu0 0.0
      %853 = vmatpush.msra.mxu0 0.0
      %854 = vmatpush.msra.mxu0 0.0
      %855 = vmatpush.msra.mxu0 0.0
      %856 = vmatpush.msra.mxu0 %v735
      %857 = vmatpush.msra.mxu0 %v732
      %858 = vmatpush.msra.mxu0 %v729
      %859 = vmatpush.msra.mxu0 %v726
      %860 = vmatpush.msra.mxu0 %v723
      %861 = vmatpush.msra.mxu0 %v720
      %862 = vmatpush.msra.mxu0 %v717
      %863 = vmatpush.msra.mxu0 %v714
      %864 = vmatmul.f32.gmra.mxu0 %v779
      %v865 = vpop.f32.mrf.mxu0
      %v866 = vadd.f32 0.0, %v865
      %867 = vmatmul.f32.gmra.mxu0 %v782
      %v868 = vpop.f32.mrf.mxu0
      %v869 = vadd.f32 0.0, %v868
      %870 = vmatmul.f32.gmra.mxu0 %v785
      %v871 = vpop.f32.mrf.mxu0
      %v872 = vadd.f32 0.0, %v871
      %873 = vmatmul.f32.gmra.mxu0 %v788
      %v874 = vpop.f32.mrf.mxu0
      %v875 = vadd.f32 0.0, %v874
      %876 = vdwg.mxu0
      %877 = vmatpush.msra.mxu0 0.0
      %878 = vmatpush.msra.mxu0 0.0
      %879 = vmatpush.msra.mxu0 0.0
      %880 = vmatpush.msra.mxu0 0.0
      %881 = vmatpush.msra.mxu0 0.0
      %882 = vmatpush.msra.mxu0 0.0
      %883 = vmatpush.msra.mxu0 0.0
      %884 = vmatpush.msra.mxu0 0.0
      %885 = vmatpush.msra.mxu0 %v776
      %886 = vmatpush.msra.mxu0 %v773
      %887 = vmatpush.msra.mxu0 %v770
      %888 = vmatpush.msra.mxu0 %v767
      %889 = vmatpush.msra.mxu0 %v764
      %890 = vmatpush.msra.mxu0 %v761
      %891 = vmatpush.msra.mxu0 %v758
      %892 = vmatpush.msra.mxu0 %v755
      %893 = vmatmul.f32.gmra.mxu0 %v779
      %v894 = vpop.f32.mrf.mxu0
      %v895 = vadd.f32 0.0, %v894
      %896 = vmatmul.f32.gmra.mxu0 %v782
      %v897 = vpop.f32.mrf.mxu0
      %v898 = vadd.f32 0.0, %v897
      %899 = vmatmul.f32.gmra.mxu0 %v785
      %v900 = vpop.f32.mrf.mxu0
      %v901 = vadd.f32 0.0, %v900
      %902 = vmatmul.f32.gmra.mxu0 %v788
      %v903 = vpop.f32.mrf.mxu0
      %v904 = vadd.f32 0.0, %v903
      %905 = vdwg.mxu0
      %906 = vst [vmem:[#allocation2] sm:$0xff] %v808
      %907 = vst [vmem:[#allocation2 + $0x8] sm:$0xff] %v837
      %908 = vst [vmem:[#allocation2 + $0x10] sm:$0xff] %v866
      %909 = vst [vmem:[#allocation2 + $0x18] sm:$0xff] %v895
      %910 = vst [vmem:[#allocation2 + $0x20] sm:$0xff] %v811
      %911 = vst [vmem:[#allocation2 + $0x28] sm:$0xff] %v840
      %912 = vst [vmem:[#allocation2 + $0x30] sm:$0xff] %v869
      %913 = vst [vmem:[#allocation2 + $0x38] sm:$0xff] %v898
      %914 = vst [vmem:[#allocation2 + $0x40] sm:$0xff] %v814
      %915 = vst [vmem:[#allocation2 + $0x48] sm:$0xff] %v843
      %916 = vst [vmem:[#allocation2 + $0x50] sm:$0xff] %v872
      %917 = vst [vmem:[#allocation2 + $0x58] sm:$0xff] %v901
      %918 = vst [vmem:[#allocation2 + $0x60] sm:$0x1] %v817
      %919 = vst [vmem:[#allocation2 + $0x68] sm:$0x1] %v846
      %920 = vst [vmem:[#allocation2 + $0x70] sm:$0x1] %v875
      %921 = vst [vmem:[#allocation2 + $0x78] sm:$0x1] %v904
      %v923 = vsel %vm369, %v456, 0
      %v926 = vsel %vm369, %v457, 0
      %v929 = vsel %vm369, %v458, 0
      %v932 = vsel %vm369, %v459, 0
      %934 = vmatpush.msra.mxu0 0.0
      %935 = vmatpush.msra.mxu0 0.0
      %936 = vmatpush.msra.mxu0 0.0
      %937 = vmatpush.msra.mxu0 0.0
      %938 = vmatpush.msra.mxu0 0.0
      %939 = vmatpush.msra.mxu0 0.0
      %940 = vmatpush.msra.mxu0 0.0
      %941 = vmatpush.msra.mxu0 0.0
      %942 = vmatpush.msra.mxu0 %v653
      %943 = vmatpush.msra.mxu0 %v650
      %944 = vmatpush.msra.mxu0 %v647
      %945 = vmatpush.msra.mxu0 %v644
      %946 = vmatpush.msra.mxu0 %v641
      %947 = vmatpush.msra.mxu0 %v638
      %948 = vmatpush.msra.mxu0 %v635
      %949 = vmatpush.msra.mxu0 %v632
      %950 = vmatmul.f32.gmra.mxu0 %v923
      %v951 = vpop.f32.mrf.mxu0
      %v952 = vadd.f32 0.0, %v951
      %953 = vmatmul.f32.gmra.mxu0 %v926
      %v954 = vpop.f32.mrf.mxu0
      %v955 = vadd.f32 0.0, %v954
      %956 = vmatmul.f32.gmra.mxu0 %v929
      %v957 = vpop.f32.mrf.mxu0
      %v958 = vadd.f32 0.0, %v957
      %959 = vmatmul.f32.gmra.mxu0 %v932
      %v960 = vpop.f32.mrf.mxu0
      %v961 = vadd.f32 0.0, %v960
      %962 = vdwg.mxu0
      %963 = vmatpush.msra.mxu0 0.0
      %964 = vmatpush.msra.mxu0 0.0
      %965 = vmatpush.msra.mxu0 0.0
      %966 = vmatpush.msra.mxu0 0.0
      %967 = vmatpush.msra.mxu0 0.0
      %968 = vmatpush.msra.mxu0 0.0
      %969 = vmatpush.msra.mxu0 0.0
      %970 = vmatpush.msra.mxu0 0.0
      %971 = vmatpush.msra.mxu0 %v694
      %972 = vmatpush.msra.mxu0 %v691
      %973 = vmatpush.msra.mxu0 %v688
      %974 = vmatpush.msra.mxu0 %v685
      %975 = vmatpush.msra.mxu0 %v682
      %976 = vmatpush.msra.mxu0 %v679
      %977 = vmatpush.msra.mxu0 %v676
      %978 = vmatpush.msra.mxu0 %v673
      %979 = vmatmul.f32.gmra.mxu0 %v923
      %v980 = vpop.f32.mrf.mxu0
      %v981 = vadd.f32 0.0, %v980
      %982 = vmatmul.f32.gmra.mxu0 %v926
      %v983 = vpop.f32.mrf.mxu0
      %v984 = vadd.f32 0.0, %v983
      %985 = vmatmul.f32.gmra.mxu0 %v929
      %v986 = vpop.f32.mrf.mxu0
      %v987 = vadd.f32 0.0, %v986
      %988 = vmatmul.f32.gmra.mxu0 %v932
      %v989 = vpop.f32.mrf.mxu0
      %v990 = vadd.f32 0.0, %v989
      %991 = vdwg.mxu0
      %992 = vmatpush.msra.mxu0 0.0
      %993 = vmatpush.msra.mxu0 0.0
      %994 = vmatpush.msra.mxu0 0.0
      %995 = vmatpush.msra.mxu0 0.0
      %996 = vmatpush.msra.mxu0 0.0
      %997 = vmatpush.msra.mxu0 0.0
      %998 = vmatpush.msra.mxu0 0.0
      %999 = vmatpush.msra.mxu0 0.0
      %1000 = vmatpush.msra.mxu0 %v735
      %1001 = vmatpush.msra.mxu0 %v732
      %1002 = vmatpush.msra.mxu0 %v729
      %1003 = vmatpush.msra.mxu0 %v726
      %1004 = vmatpush.msra.mxu0 %v723
      %1005 = vmatpush.msra.mxu0 %v720
      %1006 = vmatpush.msra.mxu0 %v717
      %1007 = vmatpush.msra.mxu0 %v714
      %1008 = vmatmul.f32.gmra.mxu0 %v923
      %v1009 = vpop.f32.mrf.mxu0
      %v1010 = vadd.f32 0.0, %v1009
      %1011 = vmatmul.f32.gmra.mxu0 %v926
      %v1012 = vpop.f32.mrf.mxu0
      %v1013 = vadd.f32 0.0, %v1012
      %1014 = vmatmul.f32.gmra.mxu0 %v929
      %v1015 = vpop.f32.mrf.mxu0
      %v1016 = vadd.f32 0.0, %v1015
      %1017 = vmatmul.f32.gmra.mxu0 %v932
      %v1018 = vpop.f32.mrf.mxu0
      %v1019 = vadd.f32 0.0, %v1018
      %1020 = vdwg.mxu0
      %1021 = vmatpush.msra.mxu0 0.0
      %1022 = vmatpush.msra.mxu0 0.0
      %1023 = vmatpush.msra.mxu0 0.0
      %1024 = vmatpush.msra.mxu0 0.0
      %1025 = vmatpush.msra.mxu0 0.0
      %1026 = vmatpush.msra.mxu0 0.0
      %1027 = vmatpush.msra.mxu0 0.0
      %1028 = vmatpush.msra.mxu0 0.0
      %1029 = vmatpush.msra.mxu0 %v776
      %1030 = vmatpush.msra.mxu0 %v773
      %1031 = vmatpush.msra.mxu0 %v770
      %1032 = vmatpush.msra.mxu0 %v767
      %1033 = vmatpush.msra.mxu0 %v764
      %1034 = vmatpush.msra.mxu0 %v761
      %1035 = vmatpush.msra.mxu0 %v758
      %1036 = vmatpush.msra.mxu0 %v755
      %1037 = vmatmul.f32.gmra.mxu0 %v923
      %v1038 = vpop.f32.mrf.mxu0
      %v1039 = vadd.f32 0.0, %v1038
      %1040 = vmatmul.f32.gmra.mxu0 %v926
      %v1041 = vpop.f32.mrf.mxu0
      %v1042 = vadd.f32 0.0, %v1041
      %1043 = vmatmul.f32.gmra.mxu0 %v929
      %v1044 = vpop.f32.mrf.mxu0
      %v1045 = vadd.f32 0.0, %v1044
      %1046 = vmatmul.f32.gmra.mxu0 %v932
      %v1047 = vpop.f32.mrf.mxu0
      %v1048 = vadd.f32 0.0, %v1047
      %1049 = vdwg.mxu0
      %1050 = vst [vmem:[#allocation3] sm:$0xff] %v952
      %1051 = vst [vmem:[#allocation3 + $0x8] sm:$0xff] %v981
      %1052 = vst [vmem:[#allocation3 + $0x10] sm:$0xff] %v1010
      %1053 = vst [vmem:[#allocation3 + $0x18] sm:$0xff] %v1039
      %1054 = vst [vmem:[#allocation3 + $0x20] sm:$0xff] %v955
      %1055 = vst [vmem:[#allocation3 + $0x28] sm:$0xff] %v984
      %1056 = vst [vmem:[#allocation3 + $0x30] sm:$0xff] %v1013
      %1057 = vst [vmem:[#allocation3 + $0x38] sm:$0xff] %v1042
      %1058 = vst [vmem:[#allocation3 + $0x40] sm:$0xff] %v958
      %1059 = vst [vmem:[#allocation3 + $0x48] sm:$0xff] %v987
      %1060 = vst [vmem:[#allocation3 + $0x50] sm:$0xff] %v1016
      %1061 = vst [vmem:[#allocation3 + $0x58] sm:$0xff] %v1045
      %1062 = vst [vmem:[#allocation3 + $0x60] sm:$0x1] %v961
      %1063 = vst [vmem:[#allocation3 + $0x68] sm:$0x1] %v990
      %1064 = vst [vmem:[#allocation3 + $0x70] sm:$0x1] %v1019
      %1065 = vst [vmem:[#allocation3 + $0x78] sm:$0x1] %v1048
      %v1066 = vld [vmem:[#allocation2] ss:$8 sm:$0x7]
      %v1067 = vadd.f32 %v1066, 0.0
      %v1068 = vld [vmem:[#allocation3] ss:$8 sm:$0x7]
      %v1069 = vadd.f32 %v1068, 0.0
      %s1070 = scalar_lea.vmem [#allocation2], 1
      %v1071 = vld [vmem:[%s1070] ss:$8 sm:$0xf]
      %1073 = vrot.lane.b32.xlu0 %v1071, 127
      %v1074 = vpop.permute.xlu0 %1073
      %v1075 = vrot.slane %v1074, 1
      %vm1076 = vcmask 1039360
      %v1077 = vsel %vm1076, %v1074, %v1075
      %v1079 = vadd.f32 %v1067, %v1077
      %s1080 = scalar_lea.vmem [#allocation3], 1
      %v1081 = vld [vmem:[%s1080] ss:$8 sm:$0xf]
      %1083 = vrot.lane.b32.xlu0 %v1081, 127
      %v1084 = vpop.permute.xlu0 %1083
      %v1085 = vrot.slane %v1084, 1
      %v1086 = vsel %vm1076, %v1084, %v1085
      %v1088 = vadd.f32 %v1069, %v1086
      %s1089 = scalar_lea.vmem [#allocation2], 2
      %v1090 = vld [vmem:[%s1089] ss:$8 sm:$0xf]
      %1092 = vrot.lane.b32.xlu0 %v1090, 126
      %v1093 = vpop.permute.xlu0 %1092
      %v1094 = vrot.slane %v1093, 1
      %vm1095 = vcmask 1031168
      %v1096 = vsel %vm1095, %v1093, %v1094
      %v1098 = vadd.f32 %v1079, %v1096
      %s1099 = scalar_lea.vmem [#allocation3], 2
      %v1100 = vld [vmem:[%s1099] ss:$8 sm:$0xf]
      %1102 = vrot.lane.b32.xlu0 %v1100, 126
      %v1103 = vpop.permute.xlu0 %1102
      %v1104 = vrot.slane %v1103, 1
      %v1105 = vsel %vm1095, %v1103, %v1104
      %v1107 = vadd.f32 %v1088, %v1105
      %s1108 = scalar_lea.vmem [#allocation2], 3
      %v1109 = vld [vmem:[%s1108] ss:$8 sm:$0xf]
      %1111 = vrot.lane.b32.xlu0 %v1109, 125
      %v1112 = vpop.permute.xlu0 %1111
      %v1113 = vrot.slane %v1112, 1
      %vm1114 = vcmask 1022976
      %v1115 = vsel %vm1114, %v1112, %v1113
      %v1117 = vadd.f32 %v1098, %v1115
      %s1118 = scalar_lea.vmem [#allocation3], 3
      %v1119 = vld [vmem:[%s1118] ss:$8 sm:$0xf]
      %1121 = vrot.lane.b32.xlu0 %v1119, 125
      %v1122 = vpop.permute.xlu0 %1121
      %v1123 = vrot.slane %v1122, 1
      %v1124 = vsel %vm1114, %v1122, %v1123
      %v1126 = vadd.f32 %v1107, %v1124
      %s1127 = scalar_lea.vmem [#allocation2], 4
      %v1128 = vld [vmem:[%s1127] ss:$8 sm:$0xf]
      %1130 = vrot.lane.b32.xlu0 %v1128, 124
      %v1131 = vpop.permute.xlu0 %1130
      %v1132 = vrot.slane %v1131, 1
      %vm1133 = vcmask 1014784
      %v1134 = vsel %vm1133, %v1131, %v1132
      %v1136 = vadd.f32 %v1117, %v1134
      %s1137 = scalar_lea.vmem [#allocation3], 4
      %v1138 = vld [vmem:[%s1137] ss:$8 sm:$0xf]
      %1140 = vrot.lane.b32.xlu0 %v1138, 124
      %v1141 = vpop.permute.xlu0 %1140
      %v1142 = vrot.slane %v1141, 1
      %v1143 = vsel %vm1133, %v1141, %v1142
      %v1145 = vadd.f32 %v1126, %v1143
      %s1146 = scalar_lea.vmem [#allocation2], 5
      %v1147 = vld [vmem:[%s1146] ss:$8 sm:$0xf]
      %1149 = vrot.lane.b32.xlu0 %v1147, 108
      %v1150 = vpop.permute.xlu0 %1149
      %v1151 = vrot.slane %v1150, 1
      %vm1152 = vcmask 883712
      %v1153 = vsel %vm1152, %v1150, %v1151
      %v1155 = vadd.f32 %v1136, %v1153
      %s1156 = scalar_lea.vmem [#allocation3], 5
      %v1157 = vld [vmem:[%s1156] ss:$8 sm:$0xf]
      %1159 = vrot.lane.b32.xlu0 %v1157, 108
      %v1160 = vpop.permute.xlu0 %1159
      %v1161 = vrot.slane %v1160, 1
      %v1162 = vsel %vm1152, %v1160, %v1161
      %v1164 = vadd.f32 %v1145, %v1162
      %s1165 = scalar_lea.vmem [#allocation2], 6
      %v1166 = vld [vmem:[%s1165] ss:$8 sm:$0xf]
      %1168 = vrot.lane.b32.xlu0 %v1166, 107
      %v1169 = vpop.permute.xlu0 %1168
      %v1170 = vrot.slane %v1169, 1
      %vm1171 = vcmask 875520
      %v1172 = vsel %vm1171, %v1169, %v1170
      %v1174 = vadd.f32 %v1155, %v1172
      %s1175 = scalar_lea.vmem [#allocation3], 6
      %v1176 = vld [vmem:[%s1175] ss:$8 sm:$0xf]
      %1178 = vrot.lane.b32.xlu0 %v1176, 107
      %v1179 = vpop.permute.xlu0 %1178
      %v1180 = vrot.slane %v1179, 1
      %v1181 = vsel %vm1171, %v1179, %v1180
      %v1183 = vadd.f32 %v1164, %v1181
      %s1184 = scalar_lea.vmem [#allocation2], 7
      %v1185 = vld [vmem:[%s1184] ss:$8 sm:$0xf]
      %1187 = vrot.lane.b32.xlu0 %v1185, 106
      %v1188 = vpop.permute.xlu0 %1187
      %v1189 = vrot.slane %v1188, 1
      %vm1190 = vcmask 867328
      %v1191 = vsel %vm1190, %v1188, %v1189
      %v1193 = vadd.f32 %v1174, %v1191
      %s1194 = scalar_lea.vmem [#allocation3], 7
      %v1195 = vld [vmem:[%s1194] ss:$8 sm:$0xf]
      %1197 = vrot.lane.b32.xlu0 %v1195, 106
      %v1198 = vpop.permute.xlu0 %1197
      %v1199 = vrot.slane %v1198, 1
      %v1200 = vsel %vm1190, %v1198, %v1199
      %v1202 = vadd.f32 %v1183, %v1200
      %s1203 = scalar_lea.vmem [#allocation2], 32
      %v1204 = vld [vmem:[%s1203] ss:$8 sm:$0xf]
      %1206 = vrot.lane.b32.xlu0 %v1204, 105
      %v1207 = vpop.permute.xlu0 %1206
      %v1208 = vrot.slane %v1207, 1
      %vm1209 = vcmask 859136
      %v1210 = vsel %vm1209, %v1207, %v1208
      %v1212 = vadd.f32 %v1193, %v1210
      %s1213 = scalar_lea.vmem [#allocation3], 32
      %v1214 = vld [vmem:[%s1213] ss:$8 sm:$0xf]
      %1216 = vrot.lane.b32.xlu0 %v1214, 105
      %v1217 = vpop.permute.xlu0 %1216
      %v1218 = vrot.slane %v1217, 1
      %v1219 = vsel %vm1209, %v1217, %v1218
      %v1221 = vadd.f32 %v1202, %v1219
      %s1222 = scalar_lea.vmem [#allocation2], 33
      %v1223 = vld [vmem:[%s1222] ss:$8 sm:$0xf]
      %1225 = vrot.lane.b32.xlu0 %v1223, 104
      %v1226 = vpop.permute.xlu0 %1225
      %v1227 = vrot.slane %v1226, 1
      %vm1228 = vcmask 850944
      %v1229 = vsel %vm1228, %v1226, %v1227
      %v1231 = vadd.f32 %v1212, %v1229
      %s1232 = scalar_lea.vmem [#allocation3], 33
      %v1233 = vld [vmem:[%s1232] ss:$8 sm:$0xf]
      %1235 = vrot.lane.b32.xlu0 %v1233, 104
      %v1236 = vpop.permute.xlu0 %1235
      %v1237 = vrot.slane %v1236, 1
      %v1238 = vsel %vm1228, %v1236, %v1237
      %v1240 = vadd.f32 %v1221, %v1238
      %s1241 = scalar_lea.vmem [#allocation2], 34
      %v1242 = vld [vmem:[%s1241] ss:$8 sm:$0xf]
      %1244 = vrot.lane.b32.xlu0 %v1242, 88
      %v1245 = vpop.permute.xlu0 %1244
      %v1246 = vrot.slane %v1245, 1
      %vm1247 = vcmask 719872
      %v1248 = vsel %vm1247, %v1245, %v1246
      %v1250 = vadd.f32 %v1231, %v1248
      %s1251 = scalar_lea.vmem [#allocation3], 34
      %v1252 = vld [vmem:[%s1251] ss:$8 sm:$0xf]
      %1254 = vrot.lane.b32.xlu0 %v1252, 88
      %v1255 = vpop.permute.xlu0 %1254
      %v1256 = vrot.slane %v1255, 1
      %v1257 = vsel %vm1247, %v1255, %v1256
      %v1259 = vadd.f32 %v1240, %v1257
      %s1260 = scalar_lea.vmem [#allocation2], 35
      %v1261 = vld [vmem:[%s1260] ss:$8 sm:$0xf]
      %1263 = vrot.lane.b32.xlu0 %v1261, 87
      %v1264 = vpop.permute.xlu0 %1263
      %v1265 = vrot.slane %v1264, 1
      %vm1266 = vcmask 711680
      %v1267 = vsel %vm1266, %v1264, %v1265
      %v1269 = vadd.f32 %v1250, %v1267
      %s1270 = scalar_lea.vmem [#allocation3], 35
      %v1271 = vld [vmem:[%s1270] ss:$8 sm:$0xf]
      %1273 = vrot.lane.b32.xlu0 %v1271, 87
      %v1274 = vpop.permute.xlu0 %1273
      %v1275 = vrot.slane %v1274, 1
      %v1276 = vsel %vm1266, %v1274, %v1275
      %v1278 = vadd.f32 %v1259, %v1276
      %s1279 = scalar_lea.vmem [#allocation2], 36
      %v1280 = vld [vmem:[%s1279] ss:$8 sm:$0xf]
      %1282 = vrot.lane.b32.xlu0 %v1280, 86
      %v1283 = vpop.permute.xlu0 %1282
      %v1284 = vrot.slane %v1283, 1
      %vm1285 = vcmask 703488
      %v1286 = vsel %vm1285, %v1283, %v1284
      %v1288 = vadd.f32 %v1269, %v1286
      %s1289 = scalar_lea.vmem [#allocation3], 36
      %v1290 = vld [vmem:[%s1289] ss:$8 sm:$0xf]
      %1292 = vrot.lane.b32.xlu0 %v1290, 86
      %v1293 = vpop.permute.xlu0 %1292
      %v1294 = vrot.slane %v1293, 1
      %v1295 = vsel %vm1285, %v1293, %v1294
      %v1297 = vadd.f32 %v1278, %v1295
      %s1298 = scalar_lea.vmem [#allocation2], 37
      %v1299 = vld [vmem:[%s1298] ss:$8 sm:$0xf]
      %1301 = vrot.lane.b32.xlu0 %v1299, 85
      %v1302 = vpop.permute.xlu0 %1301
      %v1303 = vrot.slane %v1302, 1
      %vm1304 = vcmask 695296
      %v1305 = vsel %vm1304, %v1302, %v1303
      %v1307 = vadd.f32 %v1288, %v1305
      %s1308 = scalar_lea.vmem [#allocation3], 37
      %v1309 = vld [vmem:[%s1308] ss:$8 sm:$0xf]
      %1311 = vrot.lane.b32.xlu0 %v1309, 85
      %v1312 = vpop.permute.xlu0 %1311
      %v1313 = vrot.slane %v1312, 1
      %v1314 = vsel %vm1304, %v1312, %v1313
      %v1316 = vadd.f32 %v1297, %v1314
      %s1317 = scalar_lea.vmem [#allocation2], 38
      %v1318 = vld [vmem:[%s1317] ss:$8 sm:$0xf]
      %1320 = vrot.lane.b32.xlu0 %v1318, 84
      %v1321 = vpop.permute.xlu0 %1320
      %v1322 = vrot.slane %v1321, 1
      %vm1323 = vcmask 687104
      %v1324 = vsel %vm1323, %v1321, %v1322
      %v1326 = vadd.f32 %v1307, %v1324
      %s1327 = scalar_lea.vmem [#allocation3], 38
      %v1328 = vld [vmem:[%s1327] ss:$8 sm:$0xf]
      %1330 = vrot.lane.b32.xlu0 %v1328, 84
      %v1331 = vpop.permute.xlu0 %1330
      %v1332 = vrot.slane %v1331, 1
      %v1333 = vsel %vm1323, %v1331, %v1332
      %v1335 = vadd.f32 %v1316, %v1333
      %s1336 = scalar_lea.vmem [#allocation2], 39
      %v1337 = vld [vmem:[%s1336] ss:$8 sm:$0xf]
      %1339 = vrot.lane.b32.xlu0 %v1337, 68
      %v1340 = vpop.permute.xlu0 %1339
      %v1341 = vrot.slane %v1340, 1
      %vm1342 = vcmask 556032
      %v1343 = vsel %vm1342, %v1340, %v1341
      %v1345 = vadd.f32 %v1326, %v1343
      %s1346 = scalar_lea.vmem [#allocation3], 39
      %v1347 = vld [vmem:[%s1346] ss:$8 sm:$0xf]
      %1349 = vrot.lane.b32.xlu0 %v1347, 68
      %v1350 = vpop.permute.xlu0 %1349
      %v1351 = vrot.slane %v1350, 1
      %v1352 = vsel %vm1342, %v1350, %v1351
      %v1354 = vadd.f32 %v1335, %v1352
      %s1355 = scalar_lea.vmem [#allocation2], 64
      %v1356 = vld [vmem:[%s1355] ss:$8 sm:$0xf]
      %1358 = vrot.lane.b32.xlu0 %v1356, 67
      %v1359 = vpop.permute.xlu0 %1358
      %v1360 = vrot.slane %v1359, 1
      %vm1361 = vcmask 547840
      %v1362 = vsel %vm1361, %v1359, %v1360
      %v1364 = vadd.f32 %v1345, %v1362
      %s1365 = scalar_lea.vmem [#allocation3], 64
      %v1366 = vld [vmem:[%s1365] ss:$8 sm:$0xf]
      %1368 = vrot.lane.b32.xlu0 %v1366, 67
      %v1369 = vpop.permute.xlu0 %1368
      %v1370 = vrot.slane %v1369, 1
      %v1371 = vsel %vm1361, %v1369, %v1370
      %v1373 = vadd.f32 %v1354, %v1371
      %s1374 = scalar_lea.vmem [#allocation2], 65
      %v1375 = vld [vmem:[%s1374] ss:$8 sm:$0xf]
      %1377 = vrot.lane.b32.xlu0 %v1375, 66
      %v1378 = vpop.permute.xlu0 %1377
      %v1379 = vrot.slane %v1378, 1
      %vm1380 = vcmask 539648
      %v1381 = vsel %vm1380, %v1378, %v1379
      %v1383 = vadd.f32 %v1364, %v1381
      %s1384 = scalar_lea.vmem [#allocation3], 65
      %v1385 = vld [vmem:[%s1384] ss:$8 sm:$0xf]
      %1387 = vrot.lane.b32.xlu0 %v1385, 66
      %v1388 = vpop.permute.xlu0 %1387
      %v1389 = vrot.slane %v1388, 1
      %v1390 = vsel %vm1380, %v1388, %v1389
      %v1392 = vadd.f32 %v1373, %v1390
      %s1393 = scalar_lea.vmem [#allocation2], 66
      %v1394 = vld [vmem:[%s1393] ss:$8 sm:$0xf]
      %1396 = vrot.lane.b32.xlu0 %v1394, 65
      %v1397 = vpop.permute.xlu0 %1396
      %v1398 = vrot.slane %v1397, 1
      %vm1399 = vcmask 531456
      %v1400 = vsel %vm1399, %v1397, %v1398
      %v1402 = vadd.f32 %v1383, %v1400
      %s1403 = scalar_lea.vmem [#allocation3], 66
      %v1404 = vld [vmem:[%s1403] ss:$8 sm:$0xf]
      %1406 = vrot.lane.b32.xlu0 %v1404, 65
      %v1407 = vpop.permute.xlu0 %1406
      %v1408 = vrot.slane %v1407, 1
      %v1409 = vsel %vm1399, %v1407, %v1408
      %v1411 = vadd.f32 %v1392, %v1409
      %s1412 = scalar_lea.vmem [#allocation2], 67
      %v1413 = vld [vmem:[%s1412] ss:$8 sm:$0xf]
      %1415 = vrot.lane.b32.xlu0 %v1413, 64
      %v1416 = vpop.permute.xlu0 %1415
      %v1417 = vrot.slane %v1416, 1
      %v1418 = vsel %vm369, %v1416, %v1417
      %v1420 = vadd.f32 %v1402, %v1418
      %s1421 = scalar_lea.vmem [#allocation3], 67
      %v1422 = vld [vmem:[%s1421] ss:$8 sm:$0xf]
      %1424 = vrot.lane.b32.xlu0 %v1422, 64
      %v1425 = vpop.permute.xlu0 %1424
      %v1426 = vrot.slane %v1425, 1
      %v1427 = vsel %vm369, %v1425, %v1426
      %v1429 = vadd.f32 %v1411, %v1427
      %s1430 = scalar_lea.vmem [#allocation2], 68
      %v1431 = vld [vmem:[%s1430] ss:$8 sm:$0xf]
      %1433 = vrot.lane.b32.xlu0 %v1431, 48
      %v1434 = vpop.permute.xlu0 %1433
      %v1435 = vrot.slane %v1434, 1
      %vm1436 = vcmask 392192
      %v1437 = vsel %vm1436, %v1434, %v1435
      %v1439 = vadd.f32 %v1420, %v1437
      %s1440 = scalar_lea.vmem [#allocation3], 68
      %v1441 = vld [vmem:[%s1440] ss:$8 sm:$0xf]
      %1443 = vrot.lane.b32.xlu0 %v1441, 48
      %v1444 = vpop.permute.xlu0 %1443
      %v1445 = vrot.slane %v1444, 1
      %v1446 = vsel %vm1436, %v1444, %v1445
      %v1448 = vadd.f32 %v1429, %v1446
      %s1449 = scalar_lea.vmem [#allocation2], 69
      %v1450 = vld [vmem:[%s1449] ss:$8 sm:$0xf]
      %1452 = vrot.lane.b32.xlu0 %v1450, 47
      %v1453 = vpop.permute.xlu0 %1452
      %v1454 = vrot.slane %v1453, 1
      %vm1455 = vcmask 384000
      %v1456 = vsel %vm1455, %v1453, %v1454
      %v1458 = vadd.f32 %v1439, %v1456
      %s1459 = scalar_lea.vmem [#allocation3], 69
      %v1460 = vld [vmem:[%s1459] ss:$8 sm:$0xf]
      %1462 = vrot.lane.b32.xlu0 %v1460, 47
      %v1463 = vpop.permute.xlu0 %1462
      %v1464 = vrot.slane %v1463, 1
      %v1465 = vsel %vm1455, %v1463, %v1464
      %v1467 = vadd.f32 %v1448, %v1465
      %s1468 = scalar_lea.vmem [#allocation2], 70
      %v1469 = vld [vmem:[%s1468] ss:$8 sm:$0xf]
      %1471 = vrot.lane.b32.xlu0 %v1469, 46
      %v1472 = vpop.permute.xlu0 %1471
      %v1473 = vrot.slane %v1472, 1
      %vm1474 = vcmask 375808
      %v1475 = vsel %vm1474, %v1472, %v1473
      %v1477 = vadd.f32 %v1458, %v1475
      %s1478 = scalar_lea.vmem [#allocation3], 70
      %v1479 = vld [vmem:[%s1478] ss:$8 sm:$0xf]
      %1481 = vrot.lane.b32.xlu0 %v1479, 46
      %v1482 = vpop.permute.xlu0 %1481
      %v1483 = vrot.slane %v1482, 1
      %v1484 = vsel %vm1474, %v1482, %v1483
      %v1486 = vadd.f32 %v1467, %v1484
      %s1487 = scalar_lea.vmem [#allocation2], 71
      %v1488 = vld [vmem:[%s1487] ss:$8 sm:$0xf]
      %1490 = vrot.lane.b32.xlu0 %v1488, 45
      %v1491 = vpop.permute.xlu0 %1490
      %v1492 = vrot.slane %v1491, 1
      %vm1493 = vcmask 367616
      %v1494 = vsel %vm1493, %v1491, %v1492
      %v1496 = vadd.f32 %v1477, %v1494
      %s1497 = scalar_lea.vmem [#allocation3], 71
      %v1498 = vld [vmem:[%s1497] ss:$8 sm:$0xf]
      %1500 = vrot.lane.b32.xlu0 %v1498, 45
      %v1501 = vpop.permute.xlu0 %1500
      %v1502 = vrot.slane %v1501, 1
      %v1503 = vsel %vm1493, %v1501, %v1502
      %v1505 = vadd.f32 %v1486, %v1503
      %s1506 = scalar_lea.vmem [#allocation2], 96
      %v1507 = vld [vmem:[%s1506] ss:$8 sm:$0xf]
      %1509 = vrot.lane.b32.xlu0 %v1507, 44
      %v1510 = vpop.permute.xlu0 %1509
      %v1511 = vrot.slane %v1510, 1
      %vm1512 = vcmask 359424
      %v1513 = vsel %vm1512, %v1510, %v1511
      %v1515 = vadd.f32 %v1496, %v1513
      %s1516 = scalar_lea.vmem [#allocation3], 96
      %v1517 = vld [vmem:[%s1516] ss:$8 sm:$0xf]
      %1519 = vrot.lane.b32.xlu0 %v1517, 44
      %v1520 = vpop.permute.xlu0 %1519
      %v1521 = vrot.slane %v1520, 1
      %v1522 = vsel %vm1512, %v1520, %v1521
      %v1524 = vadd.f32 %v1505, %v1522
      %v1525 = vlaneseq
      %vm1526 = vcmp.ge.s32.totalorder %v1525, 0
      %vm1527 = vcmp.lt.s32.totalorder %v1525, 384
      %vm1528 = vmand %vm1526, %vm1527
      %1529 = vst.msk [vmem:[%s352] ss:$2 sm:$0x7] %vm1528, %v1515
      %s1530 = scalar_lea.vmem %s352, 1
      %1531 = vst.msk [vmem:[%s1530] ss:$2 sm:$0x7] %vm1528, %v1524
      %p1532 = scmp.lt.s32.totalorder %s20, 1
      %s1533 = scalar_select %p1532, %s20, 1
      %s1534 = smul.addr %s1533, 3
      %s1535 = smul.addr %s1534, 2
      %s1536 = scalar_lea.vmem %s9, %s1535
      // Predicated region
      $region57: #{siamfc_head_loc.1} parent=55 // pred_check
        %p1537 = pneg %p237
      $region58: #{siamfc_head_loc.1} parent=55 // pred_check_branch
        %1539 = sbr.rel (%p1537) target = $region60
      $region59: #{siamfc_head_loc.1} parent=55 // pred_region
        _
      $region60: #{siamfc_head_loc.1} parent=55 // pred_fallthru
        _
    $region56: #{siamfc_head_loc.1} parent=5 // pred_fallthru
      _
    %p1540 = scmp.le.s32.totalorder 2, %s15
    // Predicated region
    $region61: #{siamfc_head_loc.1} parent=5 // pred_check
      %p1541 = pneg %p1540
    $region62: #{siamfc_head_loc.1} parent=5 // pred_check_branch
      %1543 = sbr.rel (%p1541) target = $region64
    $region63: #{siamfc_head_loc.1} parent=5 // pred_region
      %s1544 = ssub.s32 %s15, 2
      // Predicated region
      $region65: #{siamfc_head_loc.1} parent=63 // pred_check
        %p1545 = pneg %p243
      $region66: #{siamfc_head_loc.1} parent=63 // pred_check_branch
        %1547 = sbr.rel (%p1545) target = $region68
      $region67: #{siamfc_head_loc.1} parent=63 // pred_region
        %p1548 = scmp.lt.s32.totalorder %s21, 1
        %s1549 = scalar_select %p1548, %s21, 1
        %s1550 = smul.addr %s1549, 3
        %s1551 = smul.addr %s1550, 2
        %s1552 = scalar_lea.vmem %s9, %s1551
      $region68: #{siamfc_head_loc.1} parent=63 // pred_fallthru
        _
    $region64: #{siamfc_head_loc.1} parent=5 // pred_fallthru
      _
  $region6: #{siamfc_head_loc.1} parent=0 // loop_footer
    %s19 = sadd.s32 1, %s15
  $region7: #{siamfc_head_loc.1} parent=0 // loop_footer_branch
    %14 = sbr.rel target = $region3
  $region8: #{siamfc_head_loc.1} parent=0 // loop_exit
    _

</llo_original>
